<compile_context>
chip_gen: v5e
topology: v5e:2x2
jax: 0.10.0
libtpu: 0.0.40
codegen_flags: <defaults>
</compile_context>

<pallas_src>
import functools

import jax
import jax.numpy as jnp
from jax.experimental import pallas as pl
from jax.experimental.pallas import tpu as pltpu


def _se_bottleneck_kernel(x_ref, w1_ref, b1_ref, w2_ref, b2_ref,
                          w3_ref, b3_ref, sew1_ref, sew2_ref,
                          out_ref, h1pad_ref, *, W, pad):
    f32 = jnp.float32
    bf16 = jnp.bfloat16

    HW = x_ref.shape[1]
    P = w1_ref.shape[1]
    C4 = w3_ref.shape[1]

    x2d = x_ref[0]                                            # (HW, Cin) bf16

    # ---- conv1 (1x1, BN1 scale folded into w1) + bias + relu -> bf16 ----
    h1 = jnp.dot(x2d, w1_ref[...], preferred_element_type=f32)
    h1 = jnp.maximum(h1 + b1_ref[...], 0.0).astype(bf16)      # (HW, P) bf16

    # ---- write conv1 output into the row-padded flat bf16 scratch ----
    # Only the halo strips are zeroed (interior fully overwritten each step).
    h1pad_ref[0:pad, :] = jnp.zeros((pad, P), bf16)
    h1pad_ref[pad + HW:, :] = jnp.zeros((pad, P), bf16)
    h1pad_ref[pad:pad + HW, :] = h1

    # ---- conv2 (3x3, stride 1, pad 1) as 9 accumulating matmuls ----
    # Each tap is a contiguous slice of the padded scratch.  Top/bottom image
    # boundary is handled by the zero halo rows, left/right by a column mask
    # (which also covers the corner wrap-around of the flat layout).
    xpos = jax.lax.broadcasted_iota(jnp.int32, (HW, 1), 0) % W
    h2 = jnp.zeros((HW, P), f32)
    k = 0
    for dy in (-1, 0, 1):
        for dx in (-1, 0, 1):
            shift = dy * W + dx
            v = h1pad_ref[pad + shift:pad + shift + HW, :]    # (HW, P) bf16, contiguous
            if dx == -1:
                v = jnp.where(xpos >= 1, v, jnp.zeros_like(v))
            elif dx == 1:
                v = jnp.where(xpos < W - 1, v, jnp.zeros_like(v))
            h2 = h2 + jnp.dot(v, w2_ref[k], preferred_element_type=f32)
            k += 1
    h2 = jnp.maximum(h2 + b2_ref[...], 0.0)                   # (HW, P) f32
    h2b = h2.astype(bf16)

    # ---- conv3 (1x1, BN3 scale folded) + bias ----
    h3 = jnp.dot(h2b, w3_ref[...], preferred_element_type=f32) + b3_ref[...]   # (HW, C4) f32

    # ---- Squeeze-and-Excitation ----
    # Global average pool taken from h2 (commutes with the 1x1-conv affine):
    # pooled3 = mean_rows(h2) @ w3f + b3.  The ones-row matmul runs on the MXU;
    # the exact 1/(H*W) scale is applied in f32 afterwards.
    ones_row = jnp.ones((1, HW), bf16)
    pooled2 = jnp.dot(ones_row, h2b, preferred_element_type=f32) * (1.0 / HW)   # (1, P)
    pooled3 = jnp.dot(pooled2.astype(bf16), w3_ref[...],
                      preferred_element_type=f32) + b3_ref[...]                  # (1, C4)
    y = jnp.maximum(jnp.dot(pooled3.astype(bf16), sew1_ref[...],
                            preferred_element_type=f32), 0.0)                    # (1, Cmid)
    g = jax.nn.sigmoid(jnp.dot(y.astype(bf16), sew2_ref[...],
                               preferred_element_type=f32))                      # (1, C4)

    # ---- SE scale + residual add + final relu, stored in bf16 ----
    out = jnp.maximum(h3 * g + x2d.astype(f32), 0.0)          # Cin == C4
    out_ref[0] = out.astype(out_ref.dtype)


def pack_params(p):
    """Fold BN scales into bf16 weights once; reshape w2 HWIO -> tap-major (9, P, P)."""
    P = p["w1"].shape[1]
    C4 = p["w3"].shape[1]
    w1f = (p["w1"] * p["s1"].reshape(1, P)).astype(jnp.bfloat16)                 # (Cin, P)
    w2f = (p["w2"] * p["s2"].reshape(1, 1, 1, P)).reshape(9, P, P).astype(jnp.bfloat16)
    w3f = (p["w3"] * p["s3"].reshape(1, C4)).astype(jnp.bfloat16)                # (P, C4)
    return dict(
        w1=w1f, w2=w2f, w3=w3f,
        se_w1=p["se_w1"].astype(jnp.bfloat16),
        se_w2=p["se_w2"].astype(jnp.bfloat16),
        b1=p["b1"].astype(jnp.float32),
        b2=p["b2"].astype(jnp.float32),
        b3=p["b3"].astype(jnp.float32),
    )


def _vmem_cap_bytes():
    # Narrow hardware query only — never guards kernel compilation errors.
    try:
        return int(pltpu.get_tpu_info().vmem_capacity_bytes)
    except Exception:
        return 128 * 1024 * 1024


def se_bottleneck(x_nchw, packed):
    """NCHW f32 in, NCHW f32 out — same interface as the PyTorch module."""
    N, Cin, H, W = x_nchw.shape
    P = packed["w1"].shape[1]
    C4 = packed["w3"].shape[1]
    Cmid = packed["se_w1"].shape[1]
    assert Cin == C4, "downsample=None requires inplanes == planes * 4"

    HW = H * W
    pad = ((W + 1 + 15) // 16) * 16                 # halo rows (>= W+1), bf16-sublane aligned

    # NHWC, flattened spatial axis, bf16 activations into the kernel.
    # TODO(synk): in a full NHWC/bf16 network these boundary ops disappear.
    x = jnp.transpose(x_nchw, (0, 2, 3, 1)).astype(jnp.bfloat16).reshape(N, HW, Cin)

    # Explicit per-generation VMEM budget (bytes): double-buffered I/O blocks,
    # weights, bf16 halo scratch, live f32 intermediates; capped at 75% of physical.
    est = (2 * HW * Cin * 2                                   # x block (x2 buffers), bf16
           + 2 * HW * C4 * 2                                  # out block (x2 buffers), bf16
           + 2 * 2 * (Cin * P + 9 * P * P + P * C4 + 2 * C4 * Cmid)   # bf16 weights (x2)
           + 2 * 4 * (2 * P + C4)                             # f32 biases
           + (HW + 2 * pad) * P * 2                           # bf16 halo scratch
           + 4 * (2 * HW * P + 3 * HW * C4))                  # f32 intermediates
    vmem_limit = int(min(max(2 * est, 32 * 1024 * 1024),
                         int(0.75 * _vmem_cap_bytes())))

    kernel = functools.partial(_se_bottleneck_kernel, W=W, pad=pad)

    def wspec(*shape):
        return pl.BlockSpec(shape, lambda b: (0,) * len(shape))

    grid_spec = pltpu.PrefetchScalarGridSpec(
        num_scalar_prefetch=0,
        grid=(N,),
        in_specs=[
            pl.BlockSpec((1, HW, Cin), lambda b: (b, 0, 0)),   # x
            wspec(Cin, P),                                     # w1 (scale folded)
            wspec(1, P),                                       # bn1 bias
            wspec(9, P, P),                                    # w2 (tap-major, scale folded)
            wspec(1, P),                                       # bn2 bias
            wspec(P, C4),                                      # w3 (scale folded)
            wspec(1, C4),                                      # bn3 bias
            wspec(C4, Cmid),                                   # SE fc1
            wspec(Cmid, C4),                                   # SE fc2
        ],
        out_specs=pl.BlockSpec((1, HW, C4), lambda b: (b, 0, 0)),
        scratch_shapes=[pltpu.VMEM((HW + 2 * pad, P), jnp.bfloat16)],
    )

    out = pl.pallas_call(
        kernel,
        out_shape=jax.ShapeDtypeStruct((N, HW, C4), jnp.bfloat16),
        grid_spec=grid_spec,
        compiler_params=pltpu.CompilerParams(
            dimension_semantics=("parallel",),
            vmem_limit_bytes=vmem_limit),
    )(x, packed["w1"], packed["b1"], packed["w2"], packed["b2"],
      packed["w3"], packed["b3"], packed["se_w1"], packed["se_w2"])

    out = out.reshape(N, H, W, C4)
    # Cast back to f32 only to match the PyTorch f32 NCHW interface.
    return jnp.transpose(out, (0, 3, 1, 2)).astype(jnp.float32)


def init_params(key, inplanes, planes, reduction=16, eps=1e-5):
    """Deterministic synthetic parameters matching the module's shapes (f32)."""
    C4 = planes * 4
    Cmid = max(C4 // reduction, 1)
    ks = jax.random.split(key, 8)

    def bn_fold(k, c):
        k1, k2, k3, k4 = jax.random.split(k, 4)
        gamma = 1.0 + 0.1 * jax.random.normal(k1, (c,), jnp.float32)
        beta = 0.1 * jax.random.normal(k2, (c,), jnp.float32)
        mean = 0.1 * jax.random.normal(k3, (c,), jnp.float32)
        var = 0.5 + 0.5 * jax.random.uniform(k4, (c,), jnp.float32)
        scale = gamma * jax.lax.rsqrt(var + eps)
        bias = beta - mean * scale
        return scale.reshape(1, c), bias.reshape(1, c)

    w1 = 0.2 * jax.random.normal(ks[0], (inplanes, planes), jnp.float32)
    w2 = 0.2 * jax.random.normal(ks[1], (3, 3, planes, planes), jnp.float32)  # HWIO
    w3 = 0.2 * jax.random.normal(ks[2], (planes, C4), jnp.float32)
    se_w1 = 0.2 * jax.random.normal(ks[3], (C4, Cmid), jnp.float32)
    se_w2 = 0.2 * jax.random.normal(ks[4], (Cmid, C4), jnp.float32)
    s1, b1 = bn_fold(ks[5], planes)
    s2, b2 = bn_fold(ks[6], planes)
    s3, b3 = bn_fold(ks[7], C4)
    return dict(w1=w1, w2=w2, w3=w3, se_w1=se_w1, se_w2=se_w2,
                s1=s1, b1=b1, s2=s2, b2=b2, s3=s3, b3=b3)


def reference_forward(x_nchw, p):
    """Pure-JAX reference (eval-mode BN folded the same way as the kernel)."""
    f32, bf16 = jnp.float32, jnp.bfloat16
    P = p["w1"].shape[1]
    C4 = p["w3"].shape[1]
    w1f = (p["w1"] * p["s1"].reshape(1, P)).astype(bf16)
    w2f = (p["w2"] * p["s2"].reshape(1, 1, 1, P)).astype(bf16)
    w3f = (p["w3"] * p["s3"].reshape(1, C4)).astype(bf16)

    x = jnp.transpose(x_nchw, (0, 2, 3, 1)).astype(bf16)     # NHWC, bf16 activations
    xf = x.astype(f32)
    dn = ("NHWC", "HWIO", "NHWC")

    def conv(h, w, padding):
        return jax.lax.conv_general_dilated(
            h.astype(bf16), w, window_strides=(1, 1), padding=padding,
            dimension_numbers=dn, preferred_element_type=f32)

    h = jnp.maximum(conv(x, w1f[None, None], "VALID") + p["b1"].reshape(1, 1, 1, -1), 0.0)
    h = jnp.maximum(conv(h, w2f, ((1, 1), (1, 1))) + p["b2"].reshape(1, 1, 1, -1), 0.0)
    h = conv(h, w3f[None, None], "VALID") + p["b3"].reshape(1, 1, 1, -1)

    pooled = jnp.mean(h, axis=(1, 2))                                      # (N, C4) f32
    y = jnp.maximum(jnp.dot(pooled.astype(bf16), p["se_w1"].astype(bf16),
                            preferred_element_type=f32), 0.0)
    g = jax.nn.sigmoid(jnp.dot(y.astype(bf16), p["se_w2"].astype(bf16),
                               preferred_element_type=f32))                # (N, C4)

    out = jnp.maximum(h * g[:, None, None, :] + xf, 0.0)
    return jnp.transpose(out, (0, 3, 1, 2))


if __name__ == "__main__":
    key = jax.random.PRNGKey(0)

    # Small shapes consistent with the module: downsample=None => inplanes = planes*4.
    N, planes, H, W = 2, 8, 8, 8
    inplanes = planes * 4          # 32
    reduction = 16                 # SE hidden dim = 32 // 16 = 2

    params = init_params(key, inplanes, planes, reduction)
    packed = pack_params(params)
    x = jax.random.normal(jax.random.fold_in(key, 123),
                          (N, inplanes, H, W), jnp.float32)

    out = jax.block_until_ready(se_bottleneck(x, packed))
    assert out.shape == (N, inplanes, H, W)

    # Reference quantized to bf16 to mirror the kernel's bf16 output path.
    ref = reference_forward(x, params).astype(jnp.bfloat16).astype(jnp.float32)
    max_err = float(jnp.max(jnp.abs(out - ref)))
    assert jnp.allclose(out, ref, atol=3e-2, rtol=3e-2), max_err

    print("KERNEL_OK")
</pallas_src>

<mosaic_0001>
module attributes {stable_mosaic.version = 11 : i64} {
  func.func @_se_bottleneck_kernel(%arg0: i32, %arg1: memref<1x64x32xbf16, #tpu.memory_space<vmem>>, %arg2: memref<32x8xbf16, #tpu.memory_space<vmem>>, %arg3: memref<1x8xf32, #tpu.memory_space<vmem>>, %arg4: memref<9x8x8xbf16, #tpu.memory_space<vmem>>, %arg5: memref<1x8xf32, #tpu.memory_space<vmem>>, %arg6: memref<8x32xbf16, #tpu.memory_space<vmem>>, %arg7: memref<1x32xf32, #tpu.memory_space<vmem>>, %arg8: memref<32x2xbf16, #tpu.memory_space<vmem>>, %arg9: memref<2x32xbf16, #tpu.memory_space<vmem>>, %arg10: memref<1x64x32xbf16, #tpu.memory_space<vmem>>, %arg11: memref<96x8xbf16, #tpu.memory_space<vmem>>) attributes {dimension_semantics = [#tpu.dimension_semantics<parallel>], iteration_bounds = array<i64: 2>, scalar_prefetch = 0 : i64, scratch_operands = 1 : i64, tpu.core_type = #tpu.core_type<tc>, window_params = [{transform_indices = @transform_0, window_bounds = array<i64: 1, 64, 32>}, {pipeline_mode = #tpu.pipeline_mode<synchronous>, transform_indices = @transform_1, window_bounds = array<i64: 32, 8>}, {pipeline_mode = #tpu.pipeline_mode<synchronous>, transform_indices = @transform_2, window_bounds = array<i64: 1, 8>}, {pipeline_mode = #tpu.pipeline_mode<synchronous>, transform_indices = @transform_3, window_bounds = array<i64: 9, 8, 8>}, {pipeline_mode = #tpu.pipeline_mode<synchronous>, transform_indices = @transform_4, window_bounds = array<i64: 1, 8>}, {pipeline_mode = #tpu.pipeline_mode<synchronous>, transform_indices = @transform_5, window_bounds = array<i64: 8, 32>}, {pipeline_mode = #tpu.pipeline_mode<synchronous>, transform_indices = @transform_6, window_bounds = array<i64: 1, 32>}, {pipeline_mode = #tpu.pipeline_mode<synchronous>, transform_indices = @transform_7, window_bounds = array<i64: 32, 2>}, {pipeline_mode = #tpu.pipeline_mode<synchronous>, transform_indices = @transform_8, window_bounds = array<i64: 2, 32>}, {transform_indices = @transform_9, window_bounds = array<i64: 1, 64, 32>}]} {
    %c0 = arith.constant 0 : index
    %c0_0 = arith.constant 0 : index
    %c0_1 = arith.constant 0 : index
    %0 = vector.load %arg1[%c0, %c0_0, %c0_1] : memref<1x64x32xbf16, #tpu.memory_space<vmem>>, vector<1x64x32xbf16>
    %1 = vector.shape_cast %0 : vector<1x64x32xbf16> to vector<64x32xbf16>
    %c0_2 = arith.constant 0 : index
    %c0_3 = arith.constant 0 : index
    %2 = vector.load %arg2[%c0_2, %c0_3] : memref<32x8xbf16, #tpu.memory_space<vmem>>, vector<32x8xbf16>
    %cst = arith.constant dense<0.000000e+00> : vector<64x8xf32>
    %3 = tpu.matmul %1, %2, %cst {dimension_numbers = #tpu.dot_dimension_numbers<[1], [0], [0], [1], [0, 0, 1, 1], [], []>} : vector<64x32xbf16>, vector<32x8xbf16>, vector<64x8xf32> -> vector<64x8xf32>
    %c0_4 = arith.constant 0 : index
    %c0_5 = arith.constant 0 : index
    %4 = vector.load %arg3[%c0_4, %c0_5] : memref<1x8xf32, #tpu.memory_space<vmem>>, vector<1x8xf32>
    %5 = vector.broadcast %4 : vector<1x8xf32> to vector<64x8xf32>
    %6 = arith.addf %3, %5 : vector<64x8xf32>
    %cst_6 = arith.constant 0.000000e+00 : f32
    %7 = vector.broadcast %cst_6 : f32 to vector<64x8xf32>
    %8 = arith.maximumf %6, %7 : vector<64x8xf32>
    %9 = arith.truncf %8 : vector<64x8xf32> to vector<64x8xbf16>
    %cst_7 = arith.constant 0.000000e+00 : bf16
    %10 = vector.broadcast %cst_7 : bf16 to vector<16x8xbf16>
    %c0_8 = arith.constant 0 : index
    %c0_9 = arith.constant 0 : index
    %11 = vector.load %arg11[%c0_8, %c0_9] : memref<96x8xbf16, #tpu.memory_space<vmem>>, vector<16x8xbf16>
    tpu.vector_store %arg11[%c0_8, %c0_9], %10 {strides = array<i32>} : memref<96x8xbf16, #tpu.memory_space<vmem>>, vector<16x8xbf16>,
    %cst_10 = arith.constant 0.000000e+00 : bf16
    %12 = vector.broadcast %cst_10 : bf16 to vector<16x8xbf16>
    %c80 = arith.constant 80 : index
    %c0_11 = arith.constant 0 : index
    %13 = vector.load %arg11[%c80, %c0_11] : memref<96x8xbf16, #tpu.memory_space<vmem>>, vector<16x8xbf16>
    tpu.vector_store %arg11[%c80, %c0_11], %12 {strides = array<i32>} : memref<96x8xbf16, #tpu.memory_space<vmem>>, vector<16x8xbf16>,
    %c16 = arith.constant 16 : index
    %c0_12 = arith.constant 0 : index
    %14 = vector.load %arg11[%c16, %c0_12] : memref<96x8xbf16, #tpu.memory_space<vmem>>, vector<64x8xbf16>
    tpu.vector_store %arg11[%c16, %c0_12], %9 {strides = array<i32>} : memref<96x8xbf16, #tpu.memory_space<vmem>>, vector<64x8xbf16>,
    %15 = tpu.iota {dimensions = array<i32: 0>} : vector<64x1xi32>
    %c8_i32 = arith.constant 8 : i32
    %c0_i32 = arith.constant 0 : i32
    %16 = arith.cmpi eq, %c8_i32, %c0_i32 : i32
    %c1_i32 = arith.constant 1 : i32
    %17 = arith.select %16, %c1_i32, %c8_i32 : i32
    %18 = vector.broadcast %17 : i32 to vector<64x1xi32>
    %19 = arith.remsi %15, %18 : vector<64x1xi32>
    %c0_i32_13 = arith.constant 0 : i32
    %20 = vector.broadcast %c0_i32_13 : i32 to vector<64x1xi32>
    %21 = arith.cmpi ne, %19, %20 : vector<64x1xi32>
    %c0_i32_14 = arith.constant 0 : i32
    %22 = vector.broadcast %c0_i32_14 : i32 to vector<64x1xi32>
    %23 = arith.cmpi slt, %19, %22 : vector<64x1xi32>
    %c0_i32_15 = arith.constant 0 : i32
    %24 = arith.cmpi slt, %17, %c0_i32_15 : i32
    %25 = vector.broadcast %24 : i1 to vector<64x1xi1>
    %26 = vector.broadcast %25 : vector<64x1xi1> to vector<64x1xi1>
    %27 = arith.xori %23, %26 : vector<64x1xi1>
    %28 = arith.andi %27, %21 : vector<64x1xi1>
    %29 = vector.broadcast %17 : i32 to vector<64x1xi32>
    %30 = arith.addi %19, %29 : vector<64x1xi32>
    %31 = arith.select %28, %30, %19 : vector<64x1xi1>, vector<64x1xi32>
    %cst_16 = arith.constant 0.000000e+00 : f32
    %32 = vector.broadcast %cst_16 : f32 to vector<64x8xf32>
    %c7 = arith.constant 7 : index
    %c0_17 = arith.constant 0 : index
    %33 = vector.load %arg11[%c7, %c0_17] : memref<96x8xbf16, #tpu.memory_space<vmem>>, vector<64x8xbf16>
    %c1_i32_18 = arith.constant 1 : i32
    %34 = vector.broadcast %c1_i32_18 : i32 to vector<64x1xi32>
    %35 = arith.cmpi sge, %31, %34 : vector<64x1xi32>
    %cst_19 = arith.constant 0.000000e+00 : bf16
    %36 = vector.broadcast %cst_19 : bf16 to vector<64x8xbf16>
    %37 = vector.shape_cast %35 : vector<64x1xi1> to vector<64x1xi1>
    %38 = vector.broadcast %37 : vector<64x1xi1> to vector<64x8xi1>
    %39 = arith.select %38, %33, %36 : vector<64x8xi1>, vector<64x8xbf16>
    %c0_20 = arith.constant 0 : index
    %c0_21 = arith.constant 0 : index
    %c0_22 = arith.constant 0 : index
    %40 = vector.load %arg4[%c0_20, %c0_21, %c0_22] : memref<9x8x8xbf16, #tpu.memory_space<vmem>>, vector<1x8x8xbf16>
    %41 = vector.shape_cast %40 : vector<1x8x8xbf16> to vector<8x8xbf16>
    %cst_23 = arith.constant dense<0.000000e+00> : vector<64x8xf32>
    %42 = tpu.matmul %39, %41, %cst_23 {dimension_numbers = #tpu.dot_dimension_numbers<[1], [0], [0], [1], [0, 0, 1, 1], [], []>} : vector<64x8xbf16>, vector<8x8xbf16>, vector<64x8xf32> -> vector<64x8xf32>
    %43 = arith.addf %32, %42 : vector<64x8xf32>
    %c8 = arith.constant 8 : index
    %c0_24 = arith.constant 0 : index
    %44 = vector.load %arg11[%c8, %c0_24] : memref<96x8xbf16, #tpu.memory_space<vmem>>, vector<64x8xbf16>
    %c1 = arith.constant 1 : index
    %c0_25 = arith.constant 0 : index
    %c0_26 = arith.constant 0 : index
    %45 = vector.load %arg4[%c1, %c0_25, %c0_26] : memref<9x8x8xbf16, #tpu.memory_space<vmem>>, vector<1x8x8xbf16>
    %46 = vector.shape_cast %45 : vector<1x8x8xbf16> to vector<8x8xbf16>
    %cst_27 = arith.constant dense<0.000000e+00> : vector<64x8xf32>
    %47 = tpu.matmul %44, %46, %cst_27 {dimension_numbers = #tpu.dot_dimension_numbers<[1], [0], [0], [1], [0, 0, 1, 1], [], []>} : vector<64x8xbf16>, vector<8x8xbf16>, vector<64x8xf32> -> vector<64x8xf32>
    %48 = arith.addf %43, %47 : vector<64x8xf32>
    %c9 = arith.constant 9 : index
    %c0_28 = arith.constant 0 : index
    %49 = vector.load %arg11[%c9, %c0_28] : memref<96x8xbf16, #tpu.memory_space<vmem>>, vector<64x8xbf16>
    %c7_i32 = arith.constant 7 : i32
    %50 = vector.broadcast %c7_i32 : i32 to vector<64x1xi32>
    %51 = arith.cmpi slt, %31, %50 : vector<64x1xi32>
    %cst_29 = arith.constant 0.000000e+00 : bf16
    %52 = vector.broadcast %cst_29 : bf16 to vector<64x8xbf16>
    %53 = vector.shape_cast %51 : vector<64x1xi1> to vector<64x1xi1>
    %54 = vector.broadcast %53 : vector<64x1xi1> to vector<64x8xi1>
    %55 = arith.select %54, %49, %52 : vector<64x8xi1>, vector<64x8xbf16>
    %c2 = arith.constant 2 : index
    %c0_30 = arith.constant 0 : index
    %c0_31 = arith.constant 0 : index
    %56 = vector.load %arg4[%c2, %c0_30, %c0_31] : memref<9x8x8xbf16, #tpu.memory_space<vmem>>, vector<1x8x8xbf16>
    %57 = vector.shape_cast %56 : vector<1x8x8xbf16> to vector<8x8xbf16>
    %cst_32 = arith.constant dense<0.000000e+00> : vector<64x8xf32>
    %58 = tpu.matmul %55, %57, %cst_32 {dimension_numbers = #tpu.dot_dimension_numbers<[1], [0], [0], [1], [0, 0, 1, 1], [], []>} : vector<64x8xbf16>, vector<8x8xbf16>, vector<64x8xf32> -> vector<64x8xf32>
    %59 = arith.addf %48, %58 : vector<64x8xf32>
    %c15 = arith.constant 15 : index
    %c0_33 = arith.constant 0 : index
    %60 = vector.load %arg11[%c15, %c0_33] : memref<96x8xbf16, #tpu.memory_space<vmem>>, vector<64x8xbf16>
    %c1_i32_34 = arith.constant 1 : i32
    %61 = vector.broadcast %c1_i32_34 : i32 to vector<64x1xi32>
    %62 = arith.cmpi sge, %31, %61 : vector<64x1xi32>
    %cst_35 = arith.constant 0.000000e+00 : bf16
    %63 = vector.broadcast %cst_35 : bf16 to vector<64x8xbf16>
    %64 = vector.shape_cast %62 : vector<64x1xi1> to vector<64x1xi1>
    %65 = vector.broadcast %64 : vector<64x1xi1> to vector<64x8xi1>
    %66 = arith.select %65, %60, %63 : vector<64x8xi1>, vector<64x8xbf16>
    %c3 = arith.constant 3 : index
    %c0_36 = arith.constant 0 : index
    %c0_37 = arith.constant 0 : index
    %67 = vector.load %arg4[%c3, %c0_36, %c0_37] : memref<9x8x8xbf16, #tpu.memory_space<vmem>>, vector<1x8x8xbf16>
    %68 = vector.shape_cast %67 : vector<1x8x8xbf16> to vector<8x8xbf16>
    %cst_38 = arith.constant dense<0.000000e+00> : vector<64x8xf32>
    %69 = tpu.matmul %66, %68, %cst_38 {dimension_numbers = #tpu.dot_dimension_numbers<[1], [0], [0], [1], [0, 0, 1, 1], [], []>} : vector<64x8xbf16>, vector<8x8xbf16>, vector<64x8xf32> -> vector<64x8xf32>
    %70 = arith.addf %59, %69 : vector<64x8xf32>
    %c16_39 = arith.constant 16 : index
    %c0_40 = arith.constant 0 : index
    %71 = vector.load %arg11[%c16_39, %c0_40] : memref<96x8xbf16, #tpu.memory_space<vmem>>, vector<64x8xbf16>
    %c4 = arith.constant 4 : index
    %c0_41 = arith.constant 0 : index
    %c0_42 = arith.constant 0 : index
    %72 = vector.load %arg4[%c4, %c0_41, %c0_42] : memref<9x8x8xbf16, #tpu.memory_space<vmem>>, vector<1x8x8xbf16>
    %73 = vector.shape_cast %72 : vector<1x8x8xbf16> to vector<8x8xbf16>
    %cst_43 = arith.constant dense<0.000000e+00> : vector<64x8xf32>
    %74 = tpu.matmul %71, %73, %cst_43 {dimension_numbers = #tpu.dot_dimension_numbers<[1], [0], [0], [1], [0, 0, 1, 1], [], []>} : vector<64x8xbf16>, vector<8x8xbf16>, vector<64x8xf32> -> vector<64x8xf32>
    %75 = arith.addf %70, %74 : vector<64x8xf32>
    %c17 = arith.constant 17 : index
    %c0_44 = arith.constant 0 : index
    %76 = vector.load %arg11[%c17, %c0_44] : memref<96x8xbf16, #tpu.memory_space<vmem>>, vector<64x8xbf16>
    %c7_i32_45 = arith.constant 7 : i32
    %77 = vector.broadcast %c7_i32_45 : i32 to vector<64x1xi32>
    %78 = arith.cmpi slt, %31, %77 : vector<64x1xi32>
    %cst_46 = arith.constant 0.000000e+00 : bf16
    %79 = vector.broadcast %cst_46 : bf16 to vector<64x8xbf16>
    %80 = vector.shape_cast %78 : vector<64x1xi1> to vector<64x1xi1>
    %81 = vector.broadcast %80 : vector<64x1xi1> to vector<64x8xi1>
    %82 = arith.select %81, %76, %79 : vector<64x8xi1>, vector<64x8xbf16>
    %c5 = arith.constant 5 : index
    %c0_47 = arith.constant 0 : index
    %c0_48 = arith.constant 0 : index
    %83 = vector.load %arg4[%c5, %c0_47, %c0_48] : memref<9x8x8xbf16, #tpu.memory_space<vmem>>, vector<1x8x8xbf16>
    %84 = vector.shape_cast %83 : vector<1x8x8xbf16> to vector<8x8xbf16>
    %cst_49 = arith.constant dense<0.000000e+00> : vector<64x8xf32>
    %85 = tpu.matmul %82, %84, %cst_49 {dimension_numbers = #tpu.dot_dimension_numbers<[1], [0], [0], [1], [0, 0, 1, 1], [], []>} : vector<64x8xbf16>, vector<8x8xbf16>, vector<64x8xf32> -> vector<64x8xf32>
    %86 = arith.addf %75, %85 : vector<64x8xf32>
    %c23 = arith.constant 23 : index
    %c0_50 = arith.constant 0 : index
    %87 = vector.load %arg11[%c23, %c0_50] : memref<96x8xbf16, #tpu.memory_space<vmem>>, vector<64x8xbf16>
    %c1_i32_51 = arith.constant 1 : i32
    %88 = vector.broadcast %c1_i32_51 : i32 to vector<64x1xi32>
    %89 = arith.cmpi sge, %31, %88 : vector<64x1xi32>
    %cst_52 = arith.constant 0.000000e+00 : bf16
    %90 = vector.broadcast %cst_52 : bf16 to vector<64x8xbf16>
    %91 = vector.shape_cast %89 : vector<64x1xi1> to vector<64x1xi1>
    %92 = vector.broadcast %91 : vector<64x1xi1> to vector<64x8xi1>
    %93 = arith.select %92, %87, %90 : vector<64x8xi1>, vector<64x8xbf16>
    %c6 = arith.constant 6 : index
    %c0_53 = arith.constant 0 : index
    %c0_54 = arith.constant 0 : index
    %94 = vector.load %arg4[%c6, %c0_53, %c0_54] : memref<9x8x8xbf16, #tpu.memory_space<vmem>>, vector<1x8x8xbf16>
    %95 = vector.shape_cast %94 : vector<1x8x8xbf16> to vector<8x8xbf16>
    %cst_55 = arith.constant dense<0.000000e+00> : vector<64x8xf32>
    %96 = tpu.matmul %93, %95, %cst_55 {dimension_numbers = #tpu.dot_dimension_numbers<[1], [0], [0], [1], [0, 0, 1, 1], [], []>} : vector<64x8xbf16>, vector<8x8xbf16>, vector<64x8xf32> -> vector<64x8xf32>
    %97 = arith.addf %86, %96 : vector<64x8xf32>
    %c24 = arith.constant 24 : index
    %c0_56 = arith.constant 0 : index
    %98 = vector.load %arg11[%c24, %c0_56] : memref<96x8xbf16, #tpu.memory_space<vmem>>, vector<64x8xbf16>
    %c7_57 = arith.constant 7 : index
    %c0_58 = arith.constant 0 : index
    %c0_59 = arith.constant 0 : index
    %99 = vector.load %arg4[%c7_57, %c0_58, %c0_59] : memref<9x8x8xbf16, #tpu.memory_space<vmem>>, vector<1x8x8xbf16>
    %100 = vector.shape_cast %99 : vector<1x8x8xbf16> to vector<8x8xbf16>
    %cst_60 = arith.constant dense<0.000000e+00> : vector<64x8xf32>
    %101 = tpu.matmul %98, %100, %cst_60 {dimension_numbers = #tpu.dot_dimension_numbers<[1], [0], [0], [1], [0, 0, 1, 1], [], []>} : vector<64x8xbf16>, vector<8x8xbf16>, vector<64x8xf32> -> vector<64x8xf32>
    %102 = arith.addf %97, %101 : vector<64x8xf32>
    %c25 = arith.constant 25 : index
    %c0_61 = arith.constant 0 : index
    %103 = vector.load %arg11[%c25, %c0_61] : memref<96x8xbf16, #tpu.memory_space<vmem>>, vector<64x8xbf16>
    %c7_i32_62 = arith.constant 7 : i32
    %104 = vector.broadcast %c7_i32_62 : i32 to vector<64x1xi32>
    %105 = arith.cmpi slt, %31, %104 : vector<64x1xi32>
    %cst_63 = arith.constant 0.000000e+00 : bf16
    %106 = vector.broadcast %cst_63 : bf16 to vector<64x8xbf16>
    %107 = vector.shape_cast %105 : vector<64x1xi1> to vector<64x1xi1>
    %108 = vector.broadcast %107 : vector<64x1xi1> to vector<64x8xi1>
    %109 = arith.select %108, %103, %106 : vector<64x8xi1>, vector<64x8xbf16>
    %c8_64 = arith.constant 8 : index
    %c0_65 = arith.constant 0 : index
    %c0_66 = arith.constant 0 : index
    %110 = vector.load %arg4[%c8_64, %c0_65, %c0_66] : memref<9x8x8xbf16, #tpu.memory_space<vmem>>, vector<1x8x8xbf16>
    %111 = vector.shape_cast %110 : vector<1x8x8xbf16> to vector<8x8xbf16>
    %cst_67 = arith.constant dense<0.000000e+00> : vector<64x8xf32>
    %112 = tpu.matmul %109, %111, %cst_67 {dimension_numbers = #tpu.dot_dimension_numbers<[1], [0], [0], [1], [0, 0, 1, 1], [], []>} : vector<64x8xbf16>, vector<8x8xbf16>, vector<64x8xf32> -> vector<64x8xf32>
    %113 = arith.addf %102, %112 : vector<64x8xf32>
    %c0_68 = arith.constant 0 : index
    %c0_69 = arith.constant 0 : index
    %114 = vector.load %arg5[%c0_68, %c0_69] : memref<1x8xf32, #tpu.memory_space<vmem>>, vector<1x8xf32>
    %115 = vector.broadcast %114 : vector<1x8xf32> to vector<64x8xf32>
    %116 = arith.addf %113, %115 : vector<64x8xf32>
    %cst_70 = arith.constant 0.000000e+00 : f32
    %117 = vector.broadcast %cst_70 : f32 to vector<64x8xf32>
    %118 = arith.maximumf %116, %117 : vector<64x8xf32>
    %119 = arith.truncf %118 : vector<64x8xf32> to vector<64x8xbf16>
    %c0_71 = arith.constant 0 : index
    %c0_72 = arith.constant 0 : index
    %120 = vector.load %arg6[%c0_71, %c0_72] : memref<8x32xbf16, #tpu.memory_space<vmem>>, vector<8x32xbf16>
    %cst_73 = arith.constant dense<0.000000e+00> : vector<64x32xf32>
    %121 = tpu.matmul %119, %120, %cst_73 {dimension_numbers = #tpu.dot_dimension_numbers<[1], [0], [0], [1], [0, 0, 1, 1], [], []>} : vector<64x8xbf16>, vector<8x32xbf16>, vector<64x32xf32> -> vector<64x32xf32>
    %c0_74 = arith.constant 0 : index
    %c0_75 = arith.constant 0 : index
    %122 = vector.load %arg7[%c0_74, %c0_75] : memref<1x32xf32, #tpu.memory_space<vmem>>, vector<1x32xf32>
    %123 = vector.broadcast %122 : vector<1x32xf32> to vector<64x32xf32>
    %124 = arith.addf %121, %123 : vector<64x32xf32>
    %cst_76 = arith.constant 1.000000e+00 : bf16
    %125 = vector.broadcast %cst_76 : bf16 to vector<1x64xbf16>
    %cst_77 = arith.constant dense<0.000000e+00> : vector<1x8xf32>
    %126 = tpu.matmul %125, %119, %cst_77 {dimension_numbers = #tpu.dot_dimension_numbers<[1], [0], [0], [1], [0, 0, 1, 1], [], []>} : vector<1x64xbf16>, vector<64x8xbf16>, vector<1x8xf32> -> vector<1x8xf32>
    %cst_78 = arith.constant 1.562500e-02 : f32
    %127 = vector.broadcast %cst_78 : f32 to vector<1x8xf32>
    %128 = arith.mulf %126, %127 : vector<1x8xf32>
    %129 = arith.truncf %128 : vector<1x8xf32> to vector<1x8xbf16>
    %c0_79 = arith.constant 0 : index
    %c0_80 = arith.constant 0 : index
    %130 = vector.load %arg6[%c0_79, %c0_80] : memref<8x32xbf16, #tpu.memory_space<vmem>>, vector<8x32xbf16>
    %cst_81 = arith.constant dense<0.000000e+00> : vector<1x32xf32>
    %131 = tpu.matmul %129, %130, %cst_81 {dimension_numbers = #tpu.dot_dimension_numbers<[1], [0], [0], [1], [0, 0, 1, 1], [], []>} : vector<1x8xbf16>, vector<8x32xbf16>, vector<1x32xf32> -> vector<1x32xf32>
    %c0_82 = arith.constant 0 : index
    %c0_83 = arith.constant 0 : index
    %132 = vector.load %arg7[%c0_82, %c0_83] : memref<1x32xf32, #tpu.memory_space<vmem>>, vector<1x32xf32>
    %133 = arith.addf %131, %132 : vector<1x32xf32>
    %134 = arith.truncf %133 : vector<1x32xf32> to vector<1x32xbf16>
    %c0_84 = arith.constant 0 : index
    %c0_85 = arith.constant 0 : index
    %135 = vector.load %arg8[%c0_84, %c0_85] : memref<32x2xbf16, #tpu.memory_space<vmem>>, vector<32x2xbf16>
    %cst_86 = arith.constant dense<0.000000e+00> : vector<1x2xf32>
    %136 = tpu.matmul %134, %135, %cst_86 {dimension_numbers = #tpu.dot_dimension_numbers<[1], [0], [0], [1], [0, 0, 1, 1], [], []>} : vector<1x32xbf16>, vector<32x2xbf16>, vector<1x2xf32> -> vector<1x2xf32>
    %cst_87 = arith.constant 0.000000e+00 : f32
    %137 = vector.broadcast %cst_87 : f32 to vector<1x2xf32>
    %138 = arith.maximumf %136, %137 : vector<1x2xf32>
    %139 = arith.truncf %138 : vector<1x2xf32> to vector<1x2xbf16>
    %c0_88 = arith.constant 0 : index
    %c0_89 = arith.constant 0 : index
    %140 = vector.load %arg9[%c0_88, %c0_89] : memref<2x32xbf16, #tpu.memory_space<vmem>>, vector<2x32xbf16>
    %cst_90 = arith.constant dense<0.000000e+00> : vector<1x32xf32>
    %141 = tpu.matmul %139, %140, %cst_90 {dimension_numbers = #tpu.dot_dimension_numbers<[1], [0], [0], [1], [0, 0, 1, 1], [], []>} : vector<1x2xbf16>, vector<2x32xbf16>, vector<1x32xf32> -> vector<1x32xf32>
    %142 = arith.negf %141 : vector<1x32xf32>
    %143 = math.exp %142 : vector<1x32xf32>
    %cst_91 = arith.constant 1.000000e+00 : f32
    %144 = vector.broadcast %cst_91 : f32 to vector<1x32xf32>
    %145 = arith.addf %144, %143 : vector<1x32xf32>
    %146 = arith.divf %144, %145 : vector<1x32xf32>
    %147 = vector.broadcast %146 : vector<1x32xf32> to vector<64x32xf32>
    %148 = arith.mulf %124, %147 : vector<64x32xf32>
    %149 = arith.extf %1 : vector<64x32xbf16> to vector<64x32xf32>
    %150 = arith.addf %148, %149 : vector<64x32xf32>
    %cst_92 = arith.constant 0.000000e+00 : f32
    %151 = vector.broadcast %cst_92 : f32 to vector<64x32xf32>
    %152 = arith.maximumf %150, %151 : vector<64x32xf32>
    %153 = arith.truncf %152 : vector<64x32xf32> to vector<64x32xbf16>
    %c0_93 = arith.constant 0 : index
    %c0_94 = arith.constant 0 : index
    %c0_95 = arith.constant 0 : index
    %154 = vector.load %arg10[%c0_93, %c0_94, %c0_95] : memref<1x64x32xbf16, #tpu.memory_space<vmem>>, vector<1x64x32xbf16>
    %155 = vector.shape_cast %154 : vector<1x64x32xbf16> to vector<64x32xbf16>
    %156 = vector.shape_cast %153 : vector<64x32xbf16> to vector<1x64x32xbf16>
    tpu.vector_store %arg10[%c0_93, %c0_94, %c0_95], %156 {strides = array<i32>} : memref<1x64x32xbf16, #tpu.memory_space<vmem>>, vector<1x64x32xbf16>,
    return
  }
  func.func @transform_0(%arg0: i32) -> (i32, i32, i32) {
    %c0_i32 = arith.constant 0 : i32
    %c0_i32_0 = arith.constant 0 : i32
    %c0_i32_1 = arith.constant 0 : i32
    return %arg0, %c0_i32, %c0_i32_0 : i32, i32, i32
  }
  func.func @transform_1(%arg0: i32) -> (i32, i32) {
    %c0_i32 = arith.constant 0 : i32
    %c0_i32_0 = arith.constant 0 : i32
    %c0_i32_1 = arith.constant 0 : i32
    return %c0_i32, %c0_i32_0 : i32, i32
  }
  func.func @transform_2(%arg0: i32) -> (i32, i32) {
    %c0_i32 = arith.constant 0 : i32
    %c0_i32_0 = arith.constant 0 : i32
    %c0_i32_1 = arith.constant 0 : i32
    return %c0_i32, %c0_i32_0 : i32, i32
  }
  func.func @transform_3(%arg0: i32) -> (i32, i32, i32) {
    %c0_i32 = arith.constant 0 : i32
    %c0_i32_0 = arith.constant 0 : i32
    %c0_i32_1 = arith.constant 0 : i32
    %c0_i32_2 = arith.constant 0 : i32
    return %c0_i32, %c0_i32_0, %c0_i32_1 : i32, i32, i32
  }
  func.func @transform_4(%arg0: i32) -> (i32, i32) {
    %c0_i32 = arith.constant 0 : i32
    %c0_i32_0 = arith.constant 0 : i32
    %c0_i32_1 = arith.constant 0 : i32
    return %c0_i32, %c0_i32_0 : i32, i32
  }
  func.func @transform_5(%arg0: i32) -> (i32, i32) {
    %c0_i32 = arith.constant 0 : i32
    %c0_i32_0 = arith.constant 0 : i32
    %c0_i32_1 = arith.constant 0 : i32
    return %c0_i32, %c0_i32_0 : i32, i32
  }
  func.func @transform_6(%arg0: i32) -> (i32, i32) {
    %c0_i32 = arith.constant 0 : i32
    %c0_i32_0 = arith.constant 0 : i32
    %c0_i32_1 = arith.constant 0 : i32
    return %c0_i32, %c0_i32_0 : i32, i32
  }
  func.func @transform_7(%arg0: i32) -> (i32, i32) {
    %c0_i32 = arith.constant 0 : i32
    %c0_i32_0 = arith.constant 0 : i32
    %c0_i32_1 = arith.constant 0 : i32
    return %c0_i32, %c0_i32_0 : i32, i32
  }
  func.func @transform_8(%arg0: i32) -> (i32, i32) {
    %c0_i32 = arith.constant 0 : i32
    %c0_i32_0 = arith.constant 0 : i32
    %c0_i32_1 = arith.constant 0 : i32
    return %c0_i32, %c0_i32_0 : i32, i32
  }
  func.func @transform_9(%arg0: i32) -> (i32, i32, i32) {
    %c0_i32 = arith.constant 0 : i32
    %c0_i32_0 = arith.constant 0 : i32
    %c0_i32_1 = arith.constant 0 : i32
    return %arg0, %c0_i32, %c0_i32_0 : i32, i32, i32
  }
}

</mosaic_0001>

<llo_original>
// kernel: tpu_custom_call.1
$region0: #{tpu_custom_call.1}
  #allocation0 [shape = 'u32[]', space=smem, size = 0x4, offset = 0x4, fixed_abs, tag = 'smem constant byte address 0x4 - core index']
  #allocation1 [shape = 'u32[72,128]{1,0:T(1,128)}', space=vmem, size = 0x9000, scoped, tag = 'internal scratch']
  #allocation2 [shape = 'bf16[96,8]{1,0:T(8,128)(2,1)}', space=vmem, size = 0x6000, scoped, tag = 'scratch operand']
  %s0 = inlined_call_operand.vmem [shape: bf16[2,64,32], index: 0, kind: input, shape index: {}]
  %s1 = inlined_call_operand.vmem [shape: bf16[32,8], index: 1, kind: input, shape index: {}]
  %s2 = inlined_call_operand.vmem [shape: f32[1,8], index: 2, kind: input, shape index: {}]
  %s3 = inlined_call_operand.vmem [shape: bf16[9,8,8], index: 3, kind: input, shape index: {}]
  %s4 = inlined_call_operand.vmem [shape: f32[1,8], index: 4, kind: input, shape index: {}]
  %s5 = inlined_call_operand.vmem [shape: bf16[8,32], index: 5, kind: input, shape index: {}]
  %s6 = inlined_call_operand.vmem [shape: f32[1,32], index: 6, kind: input, shape index: {}]
  %s7 = inlined_call_operand.vmem [shape: bf16[32,2], index: 7, kind: input, shape index: {}]
  %s8 = inlined_call_operand.vmem [shape: bf16[2,32], index: 8, kind: input, shape index: {}]
  %s9 = inlined_call_operand.vmem [shape: bf16[2,64,32], index: 9, kind: output, shape index: {}]
  %s10 = sld [smem:[#allocation0]]
  $region69: #{tpu_custom_call.1} parent=0
    _
  %s12 = ssub.s32 1, %s10
  %s13 = scalar_select 0, %s12, %s10
  loop: start=0, step=1, limit=4
  $region2: #{tpu_custom_call.1} parent=0 // loop_pre_header
    _
  $region3: #{tpu_custom_call.1} parent=0 // loop_header
    %s15 = sphi 0, %s19
    %p16 = scmp.ge.s32.totalorder %s15, 4
    %s25 = sphi 0, %s27
    %s28 = sphi 0, %s25
    %s29 = sphi 0, %s28
    %s45 = sphi 0, %s29
    %s49 = sphi 0, %s49
    %s51 = sphi 0, %s49
    %s52 = sphi 0, %s51
    %s66 = sphi 0, %s52
    %s70 = sphi 0, %s70
    %s72 = sphi 0, %s70
    %s73 = sphi 0, %s72
    %s87 = sphi 0, %s73
    %s91 = sphi 0, %s91
    %s93 = sphi 0, %s91
    %s94 = sphi 0, %s93
    %s108 = sphi 0, %s94
    %s112 = sphi 0, %s112
    %s114 = sphi 0, %s112
    %s115 = sphi 0, %s114
    %s129 = sphi 0, %s115
    %s133 = sphi 0, %s133
    %s135 = sphi 0, %s133
    %s136 = sphi 0, %s135
    %s150 = sphi 0, %s136
    %s154 = sphi 0, %s154
    %s156 = sphi 0, %s154
    %s157 = sphi 0, %s156
    %s171 = sphi 0, %s157
    %s175 = sphi 0, %s175
    %s177 = sphi 0, %s175
    %s178 = sphi 0, %s177
    %s192 = sphi 0, %s178
    %s196 = sphi 0, %s196
    %s198 = sphi 0, %s196
    %s199 = sphi 0, %s198
    %s213 = sphi 0, %s199
    %s219 = sphi 0, %s221
    %s222 = sphi 0, %s219
    %s223 = sphi 0, %s222
    %s239 = sphi 0, %s223
  $region4: #{tpu_custom_call.1} parent=0 // loop_header_branch
    %18 = sbr.rel (%p16) target = $region8
  $region5: #{tpu_custom_call.1} parent=0 // loop_body
    %s20 = ssub.s32 %s15, 1
    %s21 = ssub.s32 %s15, 2
    %s22 = sadd.s32 %s15, 1
    %s23 = ssub.s32 %s15, %s22
    %p24 = scmp.eq.s32.totalorder %s23, 0
    %s26 = sadd.s32 %s25, 1
    %s27 = scalar_select %p24, %s25, %s26
    %p30 = pneg %p24
    %p31 = scmp.eq.s32.totalorder %s15, 1
    %p32 = por %p30, %p31
    %p33 = scmp.ne.s32.totalorder %s25, %s28
    %p34 = scmp.eq.s32.totalorder %s15, 0
    %p35 = por %p33, %p34
    %p36 = scmp.ne.s32.totalorder %s25, %s28
    %p37 = scmp.eq.s32.totalorder %s20, 1
    %p38 = por %p36, %p37
    %p39 = scmp.ne.s32.totalorder %s28, %s29
    %p40 = scmp.eq.s32.totalorder %s20, 0
    %p41 = por %p39, %p40
    %p42 = scmp.ne.s32.totalorder %s28, %s29
    %p43 = scmp.eq.s32.totalorder %s21, 1
    %p44 = por %p42, %p43
    %p46 = scmp.ne.s32.totalorder %s29, %s45
    %p47 = scmp.eq.s32.totalorder %s21, 0
    %p48 = por %p46, %p47
    %s50 = sadd.s32 %s49, 1
    %p53 = scmp.eq.s32.totalorder %s15, 1
    %p54 = scmp.ne.s32.totalorder %s49, %s51
    %p55 = scmp.eq.s32.totalorder %s15, 0
    %p56 = por %p54, %p55
    %p57 = scmp.ne.s32.totalorder %s49, %s51
    %p58 = scmp.eq.s32.totalorder %s20, 1
    %p59 = por %p57, %p58
    %p60 = scmp.ne.s32.totalorder %s51, %s52
    %p61 = scmp.eq.s32.totalorder %s20, 0
    %p62 = por %p60, %p61
    %p63 = scmp.ne.s32.totalorder %s51, %s52
    %p64 = scmp.eq.s32.totalorder %s21, 1
    %p65 = por %p63, %p64
    %p67 = scmp.ne.s32.totalorder %s52, %s66
    %p68 = scmp.eq.s32.totalorder %s21, 0
    %p69 = por %p67, %p68
    %s71 = sadd.s32 %s70, 1
    %p74 = scmp.eq.s32.totalorder %s15, 1
    %p75 = scmp.ne.s32.totalorder %s70, %s72
    %p76 = scmp.eq.s32.totalorder %s15, 0
    %p77 = por %p75, %p76
    %p78 = scmp.ne.s32.totalorder %s70, %s72
    %p79 = scmp.eq.s32.totalorder %s20, 1
    %p80 = por %p78, %p79
    %p81 = scmp.ne.s32.totalorder %s72, %s73
    %p82 = scmp.eq.s32.totalorder %s20, 0
    %p83 = por %p81, %p82
    %p84 = scmp.ne.s32.totalorder %s72, %s73
    %p85 = scmp.eq.s32.totalorder %s21, 1
    %p86 = por %p84, %p85
    %p88 = scmp.ne.s32.totalorder %s73, %s87
    %p89 = scmp.eq.s32.totalorder %s21, 0
    %p90 = por %p88, %p89
    %s92 = sadd.s32 %s91, 1
    %p95 = scmp.eq.s32.totalorder %s15, 1
    %p96 = scmp.ne.s32.totalorder %s91, %s93
    %p97 = scmp.eq.s32.totalorder %s15, 0
    %p98 = por %p96, %p97
    %p99 = scmp.ne.s32.totalorder %s91, %s93
    %p100 = scmp.eq.s32.totalorder %s20, 1
    %p101 = por %p99, %p100
    %p102 = scmp.ne.s32.totalorder %s93, %s94
    %p103 = scmp.eq.s32.totalorder %s20, 0
    %p104 = por %p102, %p103
    %p105 = scmp.ne.s32.totalorder %s93, %s94
    %p106 = scmp.eq.s32.totalorder %s21, 1
    %p107 = por %p105, %p106
    %p109 = scmp.ne.s32.totalorder %s94, %s108
    %p110 = scmp.eq.s32.totalorder %s21, 0
    %p111 = por %p109, %p110
    %s113 = sadd.s32 %s112, 1
    %p116 = scmp.eq.s32.totalorder %s15, 1
    %p117 = scmp.ne.s32.totalorder %s112, %s114
    %p118 = scmp.eq.s32.totalorder %s15, 0
    %p119 = por %p117, %p118
    %p120 = scmp.ne.s32.totalorder %s112, %s114
    %p121 = scmp.eq.s32.totalorder %s20, 1
    %p122 = por %p120, %p121
    %p123 = scmp.ne.s32.totalorder %s114, %s115
    %p124 = scmp.eq.s32.totalorder %s20, 0
    %p125 = por %p123, %p124
    %p126 = scmp.ne.s32.totalorder %s114, %s115
    %p127 = scmp.eq.s32.totalorder %s21, 1
    %p128 = por %p126, %p127
    %p130 = scmp.ne.s32.totalorder %s115, %s129
    %p131 = scmp.eq.s32.totalorder %s21, 0
    %p132 = por %p130, %p131
    %s134 = sadd.s32 %s133, 1
    %p137 = scmp.eq.s32.totalorder %s15, 1
    %p138 = scmp.ne.s32.totalorder %s133, %s135
    %p139 = scmp.eq.s32.totalorder %s15, 0
    %p140 = por %p138, %p139
    %p141 = scmp.ne.s32.totalorder %s133, %s135
    %p142 = scmp.eq.s32.totalorder %s20, 1
    %p143 = por %p141, %p142
    %p144 = scmp.ne.s32.totalorder %s135, %s136
    %p145 = scmp.eq.s32.totalorder %s20, 0
    %p146 = por %p144, %p145
    %p147 = scmp.ne.s32.totalorder %s135, %s136
    %p148 = scmp.eq.s32.totalorder %s21, 1
    %p149 = por %p147, %p148
    %p151 = scmp.ne.s32.totalorder %s136, %s150
    %p152 = scmp.eq.s32.totalorder %s21, 0
    %p153 = por %p151, %p152
    %s155 = sadd.s32 %s154, 1
    %p158 = scmp.eq.s32.totalorder %s15, 1
    %p159 = scmp.ne.s32.totalorder %s154, %s156
    %p160 = scmp.eq.s32.totalorder %s15, 0
    %p161 = por %p159, %p160
    %p162 = scmp.ne.s32.totalorder %s154, %s156
    %p163 = scmp.eq.s32.totalorder %s20, 1
    %p164 = por %p162, %p163
    %p165 = scmp.ne.s32.totalorder %s156, %s157
    %p166 = scmp.eq.s32.totalorder %s20, 0
    %p167 = por %p165, %p166
    %p168 = scmp.ne.s32.totalorder %s156, %s157
    %p169 = scmp.eq.s32.totalorder %s21, 1
    %p170 = por %p168, %p169
    %p172 = scmp.ne.s32.totalorder %s157, %s171
    %p173 = scmp.eq.s32.totalorder %s21, 0
    %p174 = por %p172, %p173
    %s176 = sadd.s32 %s175, 1
    %p179 = scmp.eq.s32.totalorder %s15, 1
    %p180 = scmp.ne.s32.totalorder %s175, %s177
    %p181 = scmp.eq.s32.totalorder %s15, 0
    %p182 = por %p180, %p181
    %p183 = scmp.ne.s32.totalorder %s175, %s177
    %p184 = scmp.eq.s32.totalorder %s20, 1
    %p185 = por %p183, %p184
    %p186 = scmp.ne.s32.totalorder %s177, %s178
    %p187 = scmp.eq.s32.totalorder %s20, 0
    %p188 = por %p186, %p187
    %p189 = scmp.ne.s32.totalorder %s177, %s178
    %p190 = scmp.eq.s32.totalorder %s21, 1
    %p191 = por %p189, %p190
    %p193 = scmp.ne.s32.totalorder %s178, %s192
    %p194 = scmp.eq.s32.totalorder %s21, 0
    %p195 = por %p193, %p194
    %s197 = sadd.s32 %s196, 1
    %p200 = scmp.eq.s32.totalorder %s15, 1
    %p201 = scmp.ne.s32.totalorder %s196, %s198
    %p202 = scmp.eq.s32.totalorder %s15, 0
    %p203 = por %p201, %p202
    %p204 = scmp.ne.s32.totalorder %s196, %s198
    %p205 = scmp.eq.s32.totalorder %s20, 1
    %p206 = por %p204, %p205
    %p207 = scmp.ne.s32.totalorder %s198, %s199
    %p208 = scmp.eq.s32.totalorder %s20, 0
    %p209 = por %p207, %p208
    %p210 = scmp.ne.s32.totalorder %s198, %s199
    %p211 = scmp.eq.s32.totalorder %s21, 1
    %p212 = por %p210, %p211
    %p214 = scmp.ne.s32.totalorder %s199, %s213
    %p215 = scmp.eq.s32.totalorder %s21, 0
    %p216 = por %p214, %p215
    %s217 = ssub.s32 %s15, %s22
    %p218 = scmp.eq.s32.totalorder %s217, 0
    %s220 = sadd.s32 %s219, 1
    %s221 = scalar_select %p218, %s219, %s220
    %p224 = pneg %p218
    %p225 = scmp.eq.s32.totalorder %s15, 1
    %p226 = por %p224, %p225
    %p227 = scmp.ne.s32.totalorder %s219, %s222
    %p228 = scmp.eq.s32.totalorder %s15, 0
    %p229 = por %p227, %p228
    %p230 = scmp.ne.s32.totalorder %s219, %s222
    %p231 = scmp.eq.s32.totalorder %s20, 1
    %p232 = por %p230, %p231
    %p233 = scmp.ne.s32.totalorder %s222, %s223
    %p234 = scmp.eq.s32.totalorder %s20, 0
    %p235 = por %p233, %p234
    %p236 = scmp.ne.s32.totalorder %s222, %s223
    %p237 = scmp.eq.s32.totalorder %s21, 1
    %p238 = por %p236, %p237
    %p240 = scmp.ne.s32.totalorder %s223, %s239
    %p241 = scmp.eq.s32.totalorder %s21, 0
    %p242 = por %p240, %p241
    %p243 = scmp.le.s32.totalorder 1, %s15
    %p244 = scmp.lt.s32.totalorder %s15, 3
    %p245 = pnand %p243, %p244
    %p246 = pneg %p245
    // Predicated region
    $region9: #{tpu_custom_call.1} parent=5 // pred_check
      _
    $region10: #{tpu_custom_call.1} parent=5 // pred_check_branch
      %248 = sbr.rel (%p245) target = $region12
    $region11: #{tpu_custom_call.1} parent=5 // pred_region
      %s249 = ssub.s32 %s15, 1
      // Predicated region
      $region13: #{tpu_custom_call.1} parent=11 // pred_check
        %p250 = pneg %p62
      $region14: #{tpu_custom_call.1} parent=11 // pred_check_branch
        %252 = sbr.rel (%p250) target = $region16
      $region15: #{tpu_custom_call.1} parent=11 // pred_region
        _
      $region16: #{tpu_custom_call.1} parent=11 // pred_fallthru
        _
      // Predicated region
      $region17: #{tpu_custom_call.1} parent=11 // pred_check
        %p253 = pneg %p83
      $region18: #{tpu_custom_call.1} parent=11 // pred_check_branch
        %255 = sbr.rel (%p253) target = $region20
      $region19: #{tpu_custom_call.1} parent=11 // pred_region
        _
      $region20: #{tpu_custom_call.1} parent=11 // pred_fallthru
        _
      // Predicated region
      $region21: #{tpu_custom_call.1} parent=11 // pred_check
        %p256 = pneg %p104
      $region22: #{tpu_custom_call.1} parent=11 // pred_check_branch
        %258 = sbr.rel (%p256) target = $region24
      $region23: #{tpu_custom_call.1} parent=11 // pred_region
        _
      $region24: #{tpu_custom_call.1} parent=11 // pred_fallthru
        _
      // Predicated region
      $region25: #{tpu_custom_call.1} parent=11 // pred_check
        %p259 = pneg %p125
      $region26: #{tpu_custom_call.1} parent=11 // pred_check_branch
        %261 = sbr.rel (%p259) target = $region28
      $region27: #{tpu_custom_call.1} parent=11 // pred_region
        _
      $region28: #{tpu_custom_call.1} parent=11 // pred_fallthru
        _
      // Predicated region
      $region29: #{tpu_custom_call.1} parent=11 // pred_check
        %p262 = pneg %p146
      $region30: #{tpu_custom_call.1} parent=11 // pred_check_branch
        %264 = sbr.rel (%p262) target = $region32
      $region31: #{tpu_custom_call.1} parent=11 // pred_region
        _
      $region32: #{tpu_custom_call.1} parent=11 // pred_fallthru
        _
      // Predicated region
      $region33: #{tpu_custom_call.1} parent=11 // pred_check
        %p265 = pneg %p167
      $region34: #{tpu_custom_call.1} parent=11 // pred_check_branch
        %267 = sbr.rel (%p265) target = $region36
      $region35: #{tpu_custom_call.1} parent=11 // pred_region
        _
      $region36: #{tpu_custom_call.1} parent=11 // pred_fallthru
        _
      // Predicated region
      $region37: #{tpu_custom_call.1} parent=11 // pred_check
        %p268 = pneg %p188
      $region38: #{tpu_custom_call.1} parent=11 // pred_check_branch
        %270 = sbr.rel (%p268) target = $region40
      $region39: #{tpu_custom_call.1} parent=11 // pred_region
        _
      $region40: #{tpu_custom_call.1} parent=11 // pred_fallthru
        _
      // Predicated region
      $region41: #{tpu_custom_call.1} parent=11 // pred_check
        %p271 = pneg %p209
      $region42: #{tpu_custom_call.1} parent=11 // pred_check_branch
        %273 = sbr.rel (%p271) target = $region44
      $region43: #{tpu_custom_call.1} parent=11 // pred_region
        _
      $region44: #{tpu_custom_call.1} parent=11 // pred_fallthru
        _
    $region12: #{tpu_custom_call.1} parent=5 // pred_fallthru
      _
    %p274 = scmp.lt.s32.totalorder %s15, 2
    // Predicated region
    $region45: #{tpu_custom_call.1} parent=5 // pred_check
      %p275 = pneg %p274
    $region46: #{tpu_custom_call.1} parent=5 // pred_check_branch
      %277 = sbr.rel (%p275) target = $region48
    $region47: #{tpu_custom_call.1} parent=5 // pred_region
      // Predicated region
      $region49: #{tpu_custom_call.1} parent=47 // pred_check
        %p278 = pneg %p35
      $region50: #{tpu_custom_call.1} parent=47 // pred_check_branch
        %280 = sbr.rel (%p278) target = $region52
      $region51: #{tpu_custom_call.1} parent=47 // pred_region
        %p281 = scmp.lt.s32.totalorder %s15, 1
        %s282 = scalar_select %p281, %s15, 1
        %s283 = smul.addr %s282, 8
        %s284 = smul.addr %s283, 4
        %s285 = scalar_lea.vmem %s0, %s284
      $region52: #{tpu_custom_call.1} parent=47 // pred_fallthru
        _
    $region48: #{tpu_custom_call.1} parent=5 // pred_fallthru
      _
    %p286 = scmp.le.s32.totalorder 1, %s15
    %p287 = scmp.lt.s32.totalorder %s15, 3
    %p288 = pnand %p286, %p287
    %p289 = pneg %p288
    // Predicated region
    $region53: #{tpu_custom_call.1} parent=5 // pred_check
      _
    $region54: #{tpu_custom_call.1} parent=5 // pred_check_branch
      %291 = sbr.rel (%p288) target = $region56
    $region55: #{tpu_custom_call.1} parent=5 // pred_region
      %s292 = ssub.s32 %s15, 1
      %p293 = scmp.lt.s32.totalorder %s20, 1
      %s294 = scalar_select %p293, %s20, 1
      %s295 = smul.addr %s294, 8
      %s296 = smul.addr %s295, 4
      %s297 = scalar_lea.vmem %s0, %s296
      %p298 = pneg %p41
      %p299 = pneg %p38
      %p300 = pneg %p62
      %p301 = pneg %p59
      %p302 = pneg %p83
      %p303 = pneg %p80
      %p304 = pneg %p104
      %p305 = pneg %p101
      %p306 = pneg %p125
      %p307 = pneg %p122
      %p308 = pneg %p146
      %p309 = pneg %p143
      %p310 = pneg %p167
      %p311 = pneg %p164
      %p312 = pneg %p188
      %p313 = pneg %p185
      %p314 = pneg %p209
      %p315 = pneg %p206
      %p316 = pneg %p235
      %p317 = pneg %p232
      %p318 = scmp.lt.s32.totalorder %s20, 1
      %s319 = scalar_select %p318, %s20, 1
      %s320 = smul.addr %s319, 8
      %s321 = smul.addr %s320, 4
      %s322 = scalar_lea.vmem %s9, %s321
      %p323 = scmp.lt.s32.totalorder %s20, 1
      %s324 = scalar_select %p323, %s20, 1
      %s325 = smul.addr %s324, 8
      %s326 = smul.addr %s325, 4
      %s327 = scalar_lea.vmem %s0, %s326
      %p328 = scmp.lt.s32.totalorder %s20, 1
      %s329 = scalar_select %p328, %s20, 1
      %s330 = smul.addr %s329, 8
      %s331 = smul.addr %s330, 4
      %s332 = scalar_lea.vmem %s9, %s331
      %v337 = vld [vmem:[%s327] sm:$0xf]
      %v338 = vld [vmem:[%s327 + $0x4] sm:$0xf]
      %v339 = vld [vmem:[%s327 + $0x8] sm:$0xf]
      %v340 = vld [vmem:[%s327 + $0xc] sm:$0xf]
      %v341 = vld [vmem:[%s327 + $0x10] sm:$0xf]
      %v342 = vld [vmem:[%s327 + $0x14] sm:$0xf]
      %v343 = vld [vmem:[%s327 + $0x18] sm:$0xf]
      %v344 = vld [vmem:[%s327 + $0x1c] sm:$0xf]
      %v345 = vld [vmem:[%s1] sm:$0xf]
      %v346 = vld [vmem:[%s1 + $0x4] sm:$0xf]
      %v347 = vld [vmem:[%s1 + $0x8] sm:$0xf]
      %v348 = vld [vmem:[%s1 + $0xc] sm:$0xf]
      %v349 = vld [vmem:[%s2] sm:$0x1]
      %v351 = vperm.slane %v349, 0
      %v361 = vunpack.c.l.b16 %v337
      %v362 = vunpack.c.l.b16 %v338
      %v363 = vunpack.c.l.b16 %v339
      %v364 = vunpack.c.l.b16 %v340
      %v365 = vunpack.c.l.b16 %v341
      %v366 = vunpack.c.l.b16 %v342
      %v367 = vunpack.c.l.b16 %v343
      %v368 = vunpack.c.l.b16 %v344
      %v369 = vpack.c.b16 %v362, %v361
      %v370 = vpack.c.b16 %v364, %v363
      %v371 = vpack.c.b16 %v366, %v365
      %v372 = vpack.c.b16 %v368, %v367
      %v377 = vunpack.c.l.b16 %v345
      %v378 = vunpack.c.l.b16 %v346
      %v379 = vunpack.c.l.b16 %v347
      %v380 = vunpack.c.l.b16 %v348
      %v381 = vpack.c.b16 %v378, %v377
      %v382 = vpack.c.b16 %v380, %v379
      %vm385 = vcmask 261120
      %v387 = vsel %vm385, %v369, 0
      %v390 = vsel %vm385, %v370, 0
      %v393 = vsel %vm385, %v371, 0
      %v396 = vsel %vm385, %v372, 0
      %398 = vmatpush.bf16.msra.mxu0 0
      %399 = vmatpush.bf16.msra.mxu0 0
      %400 = vmatpush.bf16.msra.mxu0 0
      %401 = vmatpush.bf16.msra.mxu0 0
      %402 = vmatpush.bf16.msra.mxu0 0
      %403 = vmatpush.bf16.msra.mxu0 0
      %404 = vmatpush.bf16.msra.mxu0 %v382
      %405 = vmatpush.bf16.msra.mxu0 %v381
      %406 = vmatmul.bf16.gmra.mxu0 %v387
      %v407 = vpop.f32.mrf.mxu0
      %v408 = vadd.f32 %v351, %v407
      %v409 = vpop.f32.mrf.mxu0
      %v410 = vadd.f32 %v351, %v409
      %411 = vmatmul.bf16.gmra.mxu0 %v390
      %v412 = vpop.f32.mrf.mxu0
      %v413 = vadd.f32 %v351, %v412
      %v414 = vpop.f32.mrf.mxu0
      %v415 = vadd.f32 %v351, %v414
      %416 = vmatmul.bf16.gmra.mxu0 %v393
      %v417 = vpop.f32.mrf.mxu0
      %v418 = vadd.f32 %v351, %v417
      %v419 = vpop.f32.mrf.mxu0
      %v420 = vadd.f32 %v351, %v419
      %421 = vmatmul.bf16.gmra.mxu0 %v396
      %v422 = vpop.f32.mrf.mxu0
      %v423 = vadd.f32 %v351, %v422
      %v424 = vpop.f32.mrf.mxu0
      %v425 = vadd.f32 %v351, %v424
      %426 = vdwg.mxu0
      %v427 = vmax.f32 %v408, 0.0
      %v428 = vmax.f32 %v410, 0.0
      %v429 = vmax.f32 %v413, 0.0
      %v430 = vmax.f32 %v415, 0.0
      %v431 = vmax.f32 %v418, 0.0
      %v432 = vmax.f32 %v420, 0.0
      %v433 = vmax.f32 %v423, 0.0
      %v434 = vmax.f32 %v425, 0.0
      %v435 = vpack.c.bf16 %v427, %v427
      %v436 = vpack.c.bf16 %v428, %v428
      %v437 = vpack.c.bf16 %v429, %v429
      %v438 = vpack.c.bf16 %v430, %v430
      %v439 = vpack.c.bf16 %v431, %v431
      %v440 = vpack.c.bf16 %v432, %v432
      %v441 = vpack.c.bf16 %v433, %v433
      %v442 = vpack.c.bf16 %v434, %v434
      %vm443 = vcmask 60416
      %444 = vst.msk [vmem:[#allocation2] sm:$0xf] %vm443, 0
      %445 = vst.msk [vmem:[#allocation2 + $0x4] sm:$0xf] %vm443, 0
      %446 = vst.msk [vmem:[#allocation2 + $0x28] sm:$0xf] %vm443, 0
      %447 = vst.msk [vmem:[#allocation2 + $0x2c] sm:$0xf] %vm443, 0
      %448 = vst.msk [vmem:[#allocation2 + $0x8] sm:$0xf] %vm443, %v435
      %449 = vst.msk [vmem:[#allocation2 + $0xc] sm:$0xf] %vm443, %v436
      %450 = vst.msk [vmem:[#allocation2 + $0x10] sm:$0xf] %vm443, %v437
      %451 = vst.msk [vmem:[#allocation2 + $0x14] sm:$0xf] %vm443, %v438
      %452 = vst.msk [vmem:[#allocation2 + $0x18] sm:$0xf] %vm443, %v439
      %453 = vst.msk [vmem:[#allocation2 + $0x1c] sm:$0xf] %vm443, %v440
      %454 = vst.msk [vmem:[#allocation2 + $0x20] sm:$0xf] %vm443, %v441
      %455 = vst.msk [vmem:[#allocation2 + $0x24] sm:$0xf] %vm443, %v442
      %v456 = vlaneseq
      %v457 = vshrl.u32 %v456, 7
      %v458 = vadd.s32 %v457, 8
      %v459 = vadd.s32 %v457, 16
      %v460 = vadd.s32 %v457, 24
      %v461 = vadd.s32 %v457, 32
      %v462 = vadd.s32 %v457, 40
      %v463 = vadd.s32 %v457, 48
      %v464 = vadd.s32 %v457, 56
      %vm465 = vcmp.lt.s32.totalorder %v457, 0
      %v466 = vsub.s32 0, %v457
      %v467 = vsel %vm465, %v466, %v457
      %v468 = vshrl.u32 %v467, 3
      %v469 = vand.u32 %v467, 7
      %v470 = vsub.s32 0, %v469
      %v471 = vsel %vm465, %v470, %v469
      %vm472 = vcmp.lt.s32.totalorder %v458, 0
      %v473 = vsub.s32 0, %v458
      %v474 = vsel %vm472, %v473, %v458
      %v475 = vshrl.u32 %v474, 3
      %v476 = vand.u32 %v474, 7
      %v477 = vsub.s32 0, %v476
      %v478 = vsel %vm472, %v477, %v476
      %vm479 = vcmp.lt.s32.totalorder %v459, 0
      %v480 = vsub.s32 0, %v459
      %v481 = vsel %vm479, %v480, %v459
      %v482 = vshrl.u32 %v481, 3
      %v483 = vand.u32 %v481, 7
      %v484 = vsub.s32 0, %v483
      %v485 = vsel %vm479, %v484, %v483
      %vm486 = vcmp.lt.s32.totalorder %v460, 0
      %v487 = vsub.s32 0, %v460
      %v488 = vsel %vm486, %v487, %v460
      %v489 = vshrl.u32 %v488, 3
      %v490 = vand.u32 %v488, 7
      %v491 = vsub.s32 0, %v490
      %v492 = vsel %vm486, %v491, %v490
      %vm493 = vcmp.lt.s32.totalorder %v461, 0
      %v494 = vsub.s32 0, %v461
      %v495 = vsel %vm493, %v494, %v461
      %v496 = vshrl.u32 %v495, 3
      %v497 = vand.u32 %v495, 7
      %v498 = vsub.s32 0, %v497
      %v499 = vsel %vm493, %v498, %v497
      %vm500 = vcmp.lt.s32.totalorder %v462, 0
      %v501 = vsub.s32 0, %v462
      %v502 = vsel %vm500, %v501, %v462
      %v503 = vshrl.u32 %v502, 3
      %v504 = vand.u32 %v502, 7
      %v505 = vsub.s32 0, %v504
      %v506 = vsel %vm500, %v505, %v504
      %vm507 = vcmp.lt.s32.totalorder %v463, 0
      %v508 = vsub.s32 0, %v463
      %v509 = vsel %vm507, %v508, %v463
      %v510 = vshrl.u32 %v509, 3
      %v511 = vand.u32 %v509, 7
      %v512 = vsub.s32 0, %v511
      %v513 = vsel %vm507, %v512, %v511
      %vm514 = vcmp.lt.s32.totalorder %v464, 0
      %v515 = vsub.s32 0, %v464
      %v516 = vsel %vm514, %v515, %v464
      %v517 = vshrl.u32 %v516, 3
      %v518 = vand.u32 %v516, 7
      %v519 = vsub.s32 0, %v518
      %v520 = vsel %vm514, %v519, %v518
      %vm521 = vcmp.ne.s32.totalorder %v471, 0
      %vm522 = vcmp.ne.s32.totalorder %v478, 0
      %vm523 = vcmp.ne.s32.totalorder %v485, 0
      %vm524 = vcmp.ne.s32.totalorder %v492, 0
      %vm525 = vcmp.ne.s32.totalorder %v499, 0
      %vm526 = vcmp.ne.s32.totalorder %v506, 0
      %vm527 = vcmp.ne.s32.totalorder %v513, 0
      %vm528 = vcmp.ne.s32.totalorder %v520, 0
      %vm529 = vcmp.lt.s32.totalorder %v471, 0
      %vm530 = vcmp.lt.s32.totalorder %v478, 0
      %vm531 = vcmp.lt.s32.totalorder %v485, 0
      %vm532 = vcmp.lt.s32.totalorder %v492, 0
      %vm533 = vcmp.lt.s32.totalorder %v499, 0
      %vm534 = vcmp.lt.s32.totalorder %v506, 0
      %vm535 = vcmp.lt.s32.totalorder %v513, 0
      %vm536 = vcmp.lt.s32.totalorder %v520, 0
      %vm537 = vmand %vm529, %vm521
      %vm538 = vmand %vm530, %vm522
      %vm539 = vmand %vm531, %vm523
      %vm540 = vmand %vm532, %vm524
      %vm541 = vmand %vm533, %vm525
      %vm542 = vmand %vm534, %vm526
      %vm543 = vmand %vm535, %vm527
      %vm544 = vmand %vm536, %vm528
      %v545 = vadd.s32 %v471, 8
      %v546 = vadd.s32 %v478, 8
      %v547 = vadd.s32 %v485, 8
      %v548 = vadd.s32 %v492, 8
      %v549 = vadd.s32 %v499, 8
      %v550 = vadd.s32 %v506, 8
      %v551 = vadd.s32 %v513, 8
      %v552 = vadd.s32 %v520, 8
      %v553 = vsel %vm537, %v545, %v471
      %v554 = vsel %vm538, %v546, %v478
      %v555 = vsel %vm539, %v547, %v485
      %v556 = vsel %vm540, %v548, %v492
      %v557 = vsel %vm541, %v549, %v499
      %v558 = vsel %vm542, %v550, %v506
      %v559 = vsel %vm543, %v551, %v513
      %v560 = vsel %vm544, %v552, %v520
      %v561 = vld [vmem:[#allocation2] sm:$0x8]
      %v562 = vld [vmem:[#allocation2 + $0x4] sm:$0xf]
      %v563 = vld [vmem:[#allocation2 + $0x8] sm:$0xf]
      %v564 = vld [vmem:[#allocation2 + $0xc] sm:$0xf]
      %v565 = vld [vmem:[#allocation2 + $0x10] sm:$0xf]
      %v566 = vld [vmem:[#allocation2 + $0x14] sm:$0xf]
      %v567 = vld [vmem:[#allocation2 + $0x18] sm:$0xf]
      %v568 = vld [vmem:[#allocation2 + $0x1c] sm:$0xf]
      %v569 = vld [vmem:[#allocation2 + $0x20] sm:$0xf]
      %vm570 = vcmp.ge.s32.totalorder %v553, 1
      %vm571 = vcmp.ge.s32.totalorder %v554, 1
      %vm572 = vcmp.ge.s32.totalorder %v555, 1
      %vm573 = vcmp.ge.s32.totalorder %v556, 1
      %vm574 = vcmp.ge.s32.totalorder %v557, 1
      %vm575 = vcmp.ge.s32.totalorder %v558, 1
      %vm576 = vcmp.ge.s32.totalorder %v559, 1
      %vm577 = vcmp.ge.s32.totalorder %v560, 1
      %v578 = vsel %vm570, 1, 0
      %v579 = vsel %vm571, 1, 0
      %v580 = vsel %vm572, 1, 0
      %v581 = vsel %vm573, 1, 0
      %v582 = vsel %vm574, 1, 0
      %v583 = vsel %vm575, 1, 0
      %v584 = vsel %vm576, 1, 0
      %v585 = vsel %vm577, 1, 0
      %vm586 = vcmp.eq.s32.totalorder %v578, 1
      %vm587 = vcmp.eq.s32.totalorder %v579, 1
      %vm588 = vcmp.eq.s32.totalorder %v580, 1
      %vm589 = vcmp.eq.s32.totalorder %v581, 1
      %vm590 = vcmp.eq.s32.totalorder %v582, 1
      %vm591 = vcmp.eq.s32.totalorder %v583, 1
      %vm592 = vcmp.eq.s32.totalorder %v584, 1
      %vm593 = vcmp.eq.s32.totalorder %v585, 1
      %vm594 = vmpackc.low %vm586, %vm586
      %vm595 = vmpackc.low %vm587, %vm587
      %vm596 = vmpackc.low %vm588, %vm588
      %vm597 = vmpackc.low %vm589, %vm589
      %vm598 = vmpackc.low %vm590, %vm590
      %vm599 = vmpackc.low %vm591, %vm591
      %vm600 = vmpackc.low %vm592, %vm592
      %vm601 = vmpackc.low %vm593, %vm593
      %v602 = vsel %vm594, 65537, 0
      %v603 = vsel %vm595, 65537, 0
      %v604 = vsel %vm596, 65537, 0
      %v605 = vsel %vm597, 65537, 0
      %v606 = vsel %vm598, 65537, 0
      %v607 = vsel %vm599, 65537, 0
      %v608 = vsel %vm600, 65537, 0
      %v609 = vsel %vm601, 65537, 0
      %vm610 = vsmask.f32 3328
      %vm611 = vsmask.f32 7440
      %vm612 = vmor %vm610, %vm611
      %v614 = vshll.u32 %v602, 16
      %v616 = vrot.slane %v614, 5
      %v617 = vshrl.u32 %v602, 16
      %v619 = vrot.slane %v617, 4
      %v620 = vor.u32 %v619, %v616
      %v621 = vrot.slane %v620, 4
      %v623 = vshll.u32 %v603, 16
      %v625 = vrot.slane %v623, 5
      %v626 = vsel %vm612, %v621, %v625
      %v627 = vshrl.u32 %v603, 16
      %v629 = vrot.slane %v627, 4
      %v630 = vor.u32 %v629, %v625
      %v631 = vrot.slane %v630, 4
      %v633 = vshll.u32 %v604, 16
      %v635 = vrot.slane %v633, 5
      %v636 = vsel %vm612, %v631, %v635
      %v637 = vshrl.u32 %v604, 16
      %v639 = vrot.slane %v637, 4
      %v640 = vor.u32 %v639, %v635
      %v641 = vrot.slane %v640, 4
      %v643 = vshll.u32 %v605, 16
      %v645 = vrot.slane %v643, 5
      %v646 = vsel %vm612, %v641, %v645
      %v647 = vshrl.u32 %v605, 16
      %v649 = vrot.slane %v647, 4
      %v650 = vor.u32 %v649, %v645
      %v651 = vrot.slane %v650, 4
      %v653 = vshll.u32 %v606, 16
      %v655 = vrot.slane %v653, 5
      %v656 = vsel %vm612, %v651, %v655
      %v657 = vshrl.u32 %v606, 16
      %v659 = vrot.slane %v657, 4
      %v660 = vor.u32 %v659, %v655
      %v661 = vrot.slane %v660, 4
      %v663 = vshll.u32 %v607, 16
      %v665 = vrot.slane %v663, 5
      %v666 = vsel %vm612, %v661, %v665
      %v667 = vshrl.u32 %v607, 16
      %v669 = vrot.slane %v667, 4
      %v670 = vor.u32 %v669, %v665
      %v671 = vrot.slane %v670, 4
      %v673 = vshll.u32 %v608, 16
      %v675 = vrot.slane %v673, 5
      %v676 = vsel %vm612, %v671, %v675
      %v677 = vshrl.u32 %v608, 16
      %v679 = vrot.slane %v677, 4
      %v680 = vor.u32 %v679, %v675
      %v681 = vrot.slane %v680, 4
      %v683 = vshll.u32 %v609, 16
      %v685 = vrot.slane %v683, 5
      %v686 = vsel %vm612, %v681, %v685
      %v687 = vshrl.u32 %v609, 16
      %v689 = vrot.slane %v687, 4
      %v690 = vor.u32 %v689, %v685
      %v691 = vrot.slane %v690, 4
      %v692 = vunpack.c.l.b16 %v616
      %v693 = vunpack.c.h.b16 %v616
      %v694 = vunpack.c.l.b16 0
      %v695 = vunpack.c.h.b16 0
      %vm696 = vcmp.ne.s32.totalorder %v692, %v694
      %vm697 = vcmp.ne.s32.totalorder %v693, %v695
      %vm698 = vmpackc.low %vm697, %vm696
      %v699 = vunpack.c.l.b16 %v626
      %v700 = vunpack.c.h.b16 %v626
      %v701 = vunpack.c.l.b16 0
      %v702 = vunpack.c.h.b16 0
      %vm703 = vcmp.ne.s32.totalorder %v699, %v701
      %vm704 = vcmp.ne.s32.totalorder %v700, %v702
      %vm705 = vmpackc.low %vm704, %vm703
      %v706 = vunpack.c.l.b16 %v636
      %v707 = vunpack.c.h.b16 %v636
      %v708 = vunpack.c.l.b16 0
      %v709 = vunpack.c.h.b16 0
      %vm710 = vcmp.ne.s32.totalorder %v706, %v708
      %vm711 = vcmp.ne.s32.totalorder %v707, %v709
      %vm712 = vmpackc.low %vm711, %vm710
      %v713 = vunpack.c.l.b16 %v646
      %v714 = vunpack.c.h.b16 %v646
      %v715 = vunpack.c.l.b16 0
      %v716 = vunpack.c.h.b16 0
      %vm717 = vcmp.ne.s32.totalorder %v713, %v715
      %vm718 = vcmp.ne.s32.totalorder %v714, %v716
      %vm719 = vmpackc.low %vm718, %vm717
      %v720 = vunpack.c.l.b16 %v656
      %v721 = vunpack.c.h.b16 %v656
      %v722 = vunpack.c.l.b16 0
      %v723 = vunpack.c.h.b16 0
      %vm724 = vcmp.ne.s32.totalorder %v720, %v722
      %vm725 = vcmp.ne.s32.totalorder %v721, %v723
      %vm726 = vmpackc.low %vm725, %vm724
      %v727 = vunpack.c.l.b16 %v666
      %v728 = vunpack.c.h.b16 %v666
      %v729 = vunpack.c.l.b16 0
      %v730 = vunpack.c.h.b16 0
      %vm731 = vcmp.ne.s32.totalorder %v727, %v729
      %vm732 = vcmp.ne.s32.totalorder %v728, %v730
      %vm733 = vmpackc.low %vm732, %vm731
      %v734 = vunpack.c.l.b16 %v676
      %v735 = vunpack.c.h.b16 %v676
      %v736 = vunpack.c.l.b16 0
      %v737 = vunpack.c.h.b16 0
      %vm738 = vcmp.ne.s32.totalorder %v734, %v736
      %vm739 = vcmp.ne.s32.totalorder %v735, %v737
      %vm740 = vmpackc.low %vm739, %vm738
      %v741 = vunpack.c.l.b16 %v686
      %v742 = vunpack.c.h.b16 %v686
      %v743 = vunpack.c.l.b16 0
      %v744 = vunpack.c.h.b16 0
      %vm745 = vcmp.ne.s32.totalorder %v741, %v743
      %vm746 = vcmp.ne.s32.totalorder %v742, %v744
      %vm747 = vmpackc.low %vm746, %vm745
      %v748 = vunpack.c.l.b16 %v691
      %v749 = vunpack.c.h.b16 %v691
      %v750 = vunpack.c.l.b16 0
      %v751 = vunpack.c.h.b16 0
      %vm752 = vcmp.ne.s32.totalorder %v748, %v750
      %vm753 = vcmp.ne.s32.totalorder %v749, %v751
      %vm754 = vmpackc.low %vm753, %vm752
      %v755 = vsel %vm698, %v561, 0
      %v756 = vsel %vm705, %v562, 0
      %v757 = vsel %vm712, %v563, 0
      %v758 = vsel %vm719, %v564, 0
      %v759 = vsel %vm726, %v565, 0
      %v760 = vsel %vm733, %v566, 0
      %v761 = vsel %vm740, %v567, 0
      %v762 = vsel %vm747, %v568, 0
      %v763 = vsel %vm754, %v569, 0
      %v764 = vld [vmem:[%s3] sm:$0xf]
      %s765 = scalar_lea.vmem %s3, 4
      %v766 = vld [vmem:[%s765] sm:$0xf]
      %v775 = vunpack.c.l.b16 %v562
      %v776 = vunpack.c.l.b16 %v563
      %v777 = vunpack.c.l.b16 %v564
      %v778 = vunpack.c.l.b16 %v565
      %v779 = vunpack.c.l.b16 %v566
      %v780 = vunpack.c.l.b16 %v567
      %v781 = vunpack.c.l.b16 %v568
      %v782 = vunpack.c.l.b16 %v569
      %v783 = vpack.c.b16 %v776, %v775
      %v784 = vpack.c.b16 %v778, %v777
      %v785 = vpack.c.b16 %v780, %v779
      %v786 = vpack.c.b16 %v782, %v781
      %vm787 = vcmask 64512
      %v789 = vsel %vm787, %v783, 0
      %v792 = vsel %vm787, %v784, 0
      %v795 = vsel %vm787, %v785, 0
      %v798 = vsel %vm787, %v786, 0
      %vm800 = vcmask 1043456
      %v802 = vsel %vm800, %v766, 0
      %804 = vmatpush.bf16.msra.mxu0 0
      %805 = vmatpush.bf16.msra.mxu0 0
      %806 = vmatpush.bf16.msra.mxu0 0
      %807 = vmatpush.bf16.msra.mxu0 0
      %808 = vmatpush.bf16.msra.mxu0 0
      %809 = vmatpush.bf16.msra.mxu0 0
      %810 = vmatpush.bf16.msra.mxu0 0
      %811 = vmatpush.bf16.msra.mxu0 %v802
      %812 = vmatmul.bf16.gmra.mxu0 %v789
      %v813 = vpop.f32.mrf.mxu0
      %v814 = vadd.f32 0.0, %v813
      %v815 = vpop.f32.mrf.mxu0
      %v816 = vadd.f32 0.0, %v815
      %817 = vmatmul.bf16.gmra.mxu0 %v792
      %v818 = vpop.f32.mrf.mxu0
      %v819 = vadd.f32 0.0, %v818
      %v820 = vpop.f32.mrf.mxu0
      %v821 = vadd.f32 0.0, %v820
      %822 = vmatmul.bf16.gmra.mxu0 %v795
      %v823 = vpop.f32.mrf.mxu0
      %v824 = vadd.f32 0.0, %v823
      %v825 = vpop.f32.mrf.mxu0
      %v826 = vadd.f32 0.0, %v825
      %827 = vmatmul.bf16.gmra.mxu0 %v798
      %v828 = vpop.f32.mrf.mxu0
      %v829 = vadd.f32 0.0, %v828
      %v830 = vpop.f32.mrf.mxu0
      %v831 = vadd.f32 0.0, %v830
      %832 = vdwg.mxu0
      %v842 = vunpack.c.l.b16 %v755
      %v843 = vunpack.c.l.b16 %v756
      %v844 = vunpack.c.l.b16 %v757
      %v845 = vunpack.c.l.b16 %v758
      %v846 = vunpack.c.l.b16 %v759
      %v847 = vunpack.c.l.b16 %v760
      %v848 = vunpack.c.l.b16 %v761
      %v849 = vunpack.c.l.b16 %v762
      %v850 = vunpack.c.l.b16 %v763
      %v851 = vpack.c.b16 %v843, %v842
      %v852 = vpack.c.b16 %v845, %v844
      %v853 = vpack.c.b16 %v847, %v846
      %v854 = vpack.c.b16 %v849, %v848
      %v855 = vpack.c.b16 %v850, %v850
      %vm856 = vsmask.f32 4352
      %v858 = vshrl.u32 %v851, 16
      %v860 = vrot.slane %v858, 3
      %v861 = vshll.u32 %v851, 16
      %v863 = vrot.slane %v861, 4
      %v864 = vor.u32 %v860, %v863
      %v866 = vshrl.u32 %v852, 16
      %v868 = vrot.slane %v866, 3
      %v869 = vshll.u32 %v852, 16
      %v871 = vrot.slane %v869, 4
      %v872 = vor.u32 %v868, %v871
      %v873 = vsel %vm856, %v864, %v872
      %v875 = vshrl.u32 %v853, 16
      %v877 = vrot.slane %v875, 3
      %v878 = vshll.u32 %v853, 16
      %v880 = vrot.slane %v878, 4
      %v881 = vor.u32 %v877, %v880
      %v882 = vsel %vm856, %v872, %v881
      %v884 = vshrl.u32 %v854, 16
      %v886 = vrot.slane %v884, 3
      %v887 = vshll.u32 %v854, 16
      %v889 = vrot.slane %v887, 4
      %v890 = vor.u32 %v886, %v889
      %v891 = vsel %vm856, %v881, %v890
      %v893 = vshrl.u32 %v855, 16
      %v895 = vrot.slane %v893, 3
      %v896 = vshll.u32 %v855, 16
      %v898 = vrot.slane %v896, 4
      %v899 = vor.u32 %v895, %v898
      %v900 = vsel %vm856, %v890, %v899
      %v902 = vsel %vm787, %v873, 0
      %v905 = vsel %vm787, %v882, 0
      %v908 = vsel %vm787, %v891, 0
      %v911 = vsel %vm787, %v900, 0
      %v914 = vsel %vm800, %v764, 0
      %916 = vmatpush.bf16.msra.mxu0 0
      %917 = vmatpush.bf16.msra.mxu0 0
      %918 = vmatpush.bf16.msra.mxu0 0
      %919 = vmatpush.bf16.msra.mxu0 0
      %920 = vmatpush.bf16.msra.mxu0 0
      %921 = vmatpush.bf16.msra.mxu0 0
      %922 = vmatpush.bf16.msra.mxu0 0
      %923 = vmatpush.bf16.msra.mxu0 %v914
      %924 = vmatmul.bf16.gmra.mxu0 %v902
      %v925 = vpop.f32.mrf.mxu0
      %v926 = vadd.f32 %v814, %v925
      %v927 = vpop.f32.mrf.mxu0
      %v928 = vadd.f32 %v816, %v927
      %929 = vmatmul.bf16.gmra.mxu0 %v905
      %v930 = vpop.f32.mrf.mxu0
      %v931 = vadd.f32 %v819, %v930
      %v932 = vpop.f32.mrf.mxu0
      %v933 = vadd.f32 %v821, %v932
      %934 = vmatmul.bf16.gmra.mxu0 %v908
      %v935 = vpop.f32.mrf.mxu0
      %v936 = vadd.f32 %v824, %v935
      %v937 = vpop.f32.mrf.mxu0
      %v938 = vadd.f32 %v826, %v937
      %939 = vmatmul.bf16.gmra.mxu0 %v911
      %v940 = vpop.f32.mrf.mxu0
      %v941 = vadd.f32 %v829, %v940
      %v942 = vpop.f32.mrf.mxu0
      %v943 = vadd.f32 %v831, %v942
      %944 = vdwg.mxu0
      %v945 = vld [vmem:[#allocation2 + $0x4] sm:$0xf]
      %v946 = vld [vmem:[#allocation2 + $0x8] sm:$0xf]
      %v947 = vld [vmem:[#allocation2 + $0xc] sm:$0xf]
      %v948 = vld [vmem:[#allocation2 + $0x10] sm:$0xf]
      %v949 = vld [vmem:[#allocation2 + $0x14] sm:$0xf]
      %v950 = vld [vmem:[#allocation2 + $0x18] sm:$0xf]
      %v951 = vld [vmem:[#allocation2 + $0x1c] sm:$0xf]
      %v952 = vld [vmem:[#allocation2 + $0x20] sm:$0xf]
      %v953 = vld [vmem:[#allocation2 + $0x24] sm:$0x1]
      %vm954 = vcmp.lt.s32.totalorder %v553, 7
      %vm955 = vcmp.lt.s32.totalorder %v554, 7
      %vm956 = vcmp.lt.s32.totalorder %v555, 7
      %vm957 = vcmp.lt.s32.totalorder %v556, 7
      %vm958 = vcmp.lt.s32.totalorder %v557, 7
      %vm959 = vcmp.lt.s32.totalorder %v558, 7
      %vm960 = vcmp.lt.s32.totalorder %v559, 7
      %vm961 = vcmp.lt.s32.totalorder %v560, 7
      %v962 = vsel %vm954, 1, 0
      %v963 = vsel %vm955, 1, 0
      %v964 = vsel %vm956, 1, 0
      %v965 = vsel %vm957, 1, 0
      %v966 = vsel %vm958, 1, 0
      %v967 = vsel %vm959, 1, 0
      %v968 = vsel %vm960, 1, 0
      %v969 = vsel %vm961, 1, 0
      %vm970 = vcmp.eq.s32.totalorder %v962, 1
      %vm971 = vcmp.eq.s32.totalorder %v963, 1
      %vm972 = vcmp.eq.s32.totalorder %v964, 1
      %vm973 = vcmp.eq.s32.totalorder %v965, 1
      %vm974 = vcmp.eq.s32.totalorder %v966, 1
      %vm975 = vcmp.eq.s32.totalorder %v967, 1
      %vm976 = vcmp.eq.s32.totalorder %v968, 1
      %vm977 = vcmp.eq.s32.totalorder %v969, 1
      %vm978 = vmpackc.low %vm970, %vm970
      %vm979 = vmpackc.low %vm971, %vm971
      %vm980 = vmpackc.low %vm972, %vm972
      %vm981 = vmpackc.low %vm973, %vm973
      %vm982 = vmpackc.low %vm974, %vm974
      %vm983 = vmpackc.low %vm975, %vm975
      %vm984 = vmpackc.low %vm976, %vm976
      %vm985 = vmpackc.low %vm977, %vm977
      %v986 = vsel %vm978, 65537, 0
      %v987 = vsel %vm979, 65537, 0
      %v988 = vsel %vm980, 65537, 0
      %v989 = vsel %vm981, 65537, 0
      %v990 = vsel %vm982, 65537, 0
      %v991 = vsel %vm983, 65537, 0
      %v992 = vsel %vm984, 65537, 0
      %v993 = vsel %vm985, 65537, 0
      %vm994 = vsmask.f32 256
      %vm995 = vsmask.f32 4368
      %vm996 = vmor %vm994, %vm995
      %v998 = vshrl.u32 %v986, 16
      %v1000 = vrot.slane %v998, 7
      %v1001 = vshll.u32 %v986, 16
      %v1003 = vor.u32 %v1000, %v1001
      %v1004 = vrot.slane %v1000, 4
      %v1006 = vshrl.u32 %v987, 16
      %v1008 = vrot.slane %v1006, 7
      %v1009 = vshll.u32 %v987, 16
      %v1011 = vor.u32 %v1008, %v1009
      %v1012 = vsel %vm996, %v1004, %v1011
      %v1013 = vrot.slane %v1008, 4
      %v1015 = vshrl.u32 %v988, 16
      %v1017 = vrot.slane %v1015, 7
      %v1018 = vshll.u32 %v988, 16
      %v1020 = vor.u32 %v1017, %v1018
      %v1021 = vsel %vm996, %v1013, %v1020
      %v1022 = vrot.slane %v1017, 4
      %v1024 = vshrl.u32 %v989, 16
      %v1026 = vrot.slane %v1024, 7
      %v1027 = vshll.u32 %v989, 16
      %v1029 = vor.u32 %v1026, %v1027
      %v1030 = vsel %vm996, %v1022, %v1029
      %v1031 = vrot.slane %v1026, 4
      %v1033 = vshrl.u32 %v990, 16
      %v1035 = vrot.slane %v1033, 7
      %v1036 = vshll.u32 %v990, 16
      %v1038 = vor.u32 %v1035, %v1036
      %v1039 = vsel %vm996, %v1031, %v1038
      %v1040 = vrot.slane %v1035, 4
      %v1042 = vshrl.u32 %v991, 16
      %v1044 = vrot.slane %v1042, 7
      %v1045 = vshll.u32 %v991, 16
      %v1047 = vor.u32 %v1044, %v1045
      %v1048 = vsel %vm996, %v1040, %v1047
      %v1049 = vrot.slane %v1044, 4
      %v1051 = vshrl.u32 %v992, 16
      %v1053 = vrot.slane %v1051, 7
      %v1054 = vshll.u32 %v992, 16
      %v1056 = vor.u32 %v1053, %v1054
      %v1057 = vsel %vm996, %v1049, %v1056
      %v1058 = vrot.slane %v1053, 4
      %v1060 = vshrl.u32 %v993, 16
      %v1062 = vrot.slane %v1060, 7
      %v1063 = vshll.u32 %v993, 16
      %v1065 = vor.u32 %v1062, %v1063
      %v1066 = vsel %vm996, %v1058, %v1065
      %v1067 = vrot.slane %v1062, 4
      %v1068 = vunpack.c.l.b16 %v1003
      %v1069 = vunpack.c.h.b16 %v1003
      %v1070 = vunpack.c.l.b16 0
      %v1071 = vunpack.c.h.b16 0
      %vm1072 = vcmp.ne.s32.totalorder %v1068, %v1070
      %vm1073 = vcmp.ne.s32.totalorder %v1069, %v1071
      %vm1074 = vmpackc.low %vm1073, %vm1072
      %v1075 = vunpack.c.l.b16 %v1012
      %v1076 = vunpack.c.h.b16 %v1012
      %v1077 = vunpack.c.l.b16 0
      %v1078 = vunpack.c.h.b16 0
      %vm1079 = vcmp.ne.s32.totalorder %v1075, %v1077
      %vm1080 = vcmp.ne.s32.totalorder %v1076, %v1078
      %vm1081 = vmpackc.low %vm1080, %vm1079
      %v1082 = vunpack.c.l.b16 %v1021
      %v1083 = vunpack.c.h.b16 %v1021
      %v1084 = vunpack.c.l.b16 0
      %v1085 = vunpack.c.h.b16 0
      %vm1086 = vcmp.ne.s32.totalorder %v1082, %v1084
      %vm1087 = vcmp.ne.s32.totalorder %v1083, %v1085
      %vm1088 = vmpackc.low %vm1087, %vm1086
      %v1089 = vunpack.c.l.b16 %v1030
      %v1090 = vunpack.c.h.b16 %v1030
      %v1091 = vunpack.c.l.b16 0
      %v1092 = vunpack.c.h.b16 0
      %vm1093 = vcmp.ne.s32.totalorder %v1089, %v1091
      %vm1094 = vcmp.ne.s32.totalorder %v1090, %v1092
      %vm1095 = vmpackc.low %vm1094, %vm1093
      %v1096 = vunpack.c.l.b16 %v1039
      %v1097 = vunpack.c.h.b16 %v1039
      %v1098 = vunpack.c.l.b16 0
      %v1099 = vunpack.c.h.b16 0
      %vm1100 = vcmp.ne.s32.totalorder %v1096, %v1098
      %vm1101 = vcmp.ne.s32.totalorder %v1097, %v1099
      %vm1102 = vmpackc.low %vm1101, %vm1100
      %v1103 = vunpack.c.l.b16 %v1048
      %v1104 = vunpack.c.h.b16 %v1048
      %v1105 = vunpack.c.l.b16 0
      %v1106 = vunpack.c.h.b16 0
      %vm1107 = vcmp.ne.s32.totalorder %v1103, %v1105
      %vm1108 = vcmp.ne.s32.totalorder %v1104, %v1106
      %vm1109 = vmpackc.low %vm1108, %vm1107
      %v1110 = vunpack.c.l.b16 %v1057
      %v1111 = vunpack.c.h.b16 %v1057
      %v1112 = vunpack.c.l.b16 0
      %v1113 = vunpack.c.h.b16 0
      %vm1114 = vcmp.ne.s32.totalorder %v1110, %v1112
      %vm1115 = vcmp.ne.s32.totalorder %v1111, %v1113
      %vm1116 = vmpackc.low %vm1115, %vm1114
      %v1117 = vunpack.c.l.b16 %v1066
      %v1118 = vunpack.c.h.b16 %v1066
      %v1119 = vunpack.c.l.b16 0
      %v1120 = vunpack.c.h.b16 0
      %vm1121 = vcmp.ne.s32.totalorder %v1117, %v1119
      %vm1122 = vcmp.ne.s32.totalorder %v1118, %v1120
      %vm1123 = vmpackc.low %vm1122, %vm1121
      %v1124 = vunpack.c.l.b16 %v1067
      %v1125 = vunpack.c.h.b16 %v1067
      %v1126 = vunpack.c.l.b16 0
      %v1127 = vunpack.c.h.b16 0
      %vm1128 = vcmp.ne.s32.totalorder %v1124, %v1126
      %vm1129 = vcmp.ne.s32.totalorder %v1125, %v1127
      %vm1130 = vmpackc.low %vm1129, %vm1128
      %v1131 = vsel %vm1074, %v945, 0
      %v1132 = vsel %vm1081, %v946, 0
      %v1133 = vsel %vm1088, %v947, 0
      %v1134 = vsel %vm1095, %v948, 0
      %v1135 = vsel %vm1102, %v949, 0
      %v1136 = vsel %vm1109, %v950, 0
      %v1137 = vsel %vm1116, %v951, 0
      %v1138 = vsel %vm1123, %v952, 0
      %v1139 = vsel %vm1130, %v953, 0
      %s1140 = scalar_lea.vmem %s3, 8
      %v1141 = vld [vmem:[%s1140] sm:$0xf]
      %v1151 = vunpack.c.l.b16 %v1131
      %v1152 = vunpack.c.l.b16 %v1132
      %v1153 = vunpack.c.l.b16 %v1133
      %v1154 = vunpack.c.l.b16 %v1134
      %v1155 = vunpack.c.l.b16 %v1135
      %v1156 = vunpack.c.l.b16 %v1136
      %v1157 = vunpack.c.l.b16 %v1137
      %v1158 = vunpack.c.l.b16 %v1138
      %v1159 = vunpack.c.l.b16 %v1139
      %v1160 = vpack.c.b16 %v1152, %v1151
      %v1161 = vpack.c.b16 %v1154, %v1153
      %v1162 = vpack.c.b16 %v1156, %v1155
      %v1163 = vpack.c.b16 %v1158, %v1157
      %v1164 = vpack.c.b16 %v1159, %v1159
      %vm1165 = vsmask.f32 7424
      %v1167 = vshrl.u32 %v1160, 16
      %v1169 = vshll.u32 %v1160, 16
      %v1171 = vrot.slane %v1169, 1
      %v1172 = vor.u32 %v1167, %v1171
      %v1174 = vshll.u32 %v1161, 16
      %v1176 = vrot.slane %v1174, 1
      %v1177 = vsel %vm1165, %v1172, %v1176
      %v1178 = vshrl.u32 %v1161, 16
      %v1180 = vor.u32 %v1178, %v1176
      %v1182 = vshll.u32 %v1162, 16
      %v1184 = vrot.slane %v1182, 1
      %v1185 = vsel %vm1165, %v1180, %v1184
      %v1186 = vshrl.u32 %v1162, 16
      %v1188 = vor.u32 %v1186, %v1184
      %v1190 = vshll.u32 %v1163, 16
      %v1192 = vrot.slane %v1190, 1
      %v1193 = vsel %vm1165, %v1188, %v1192
      %v1194 = vshrl.u32 %v1163, 16
      %v1196 = vor.u32 %v1194, %v1192
      %v1198 = vshll.u32 %v1164, 16
      %v1200 = vrot.slane %v1198, 1
      %v1201 = vsel %vm1165, %v1196, %v1200
      %v1203 = vsel %vm787, %v1177, 0
      %v1206 = vsel %vm787, %v1185, 0
      %v1209 = vsel %vm787, %v1193, 0
      %v1212 = vsel %vm787, %v1201, 0
      %v1215 = vsel %vm800, %v1141, 0
      %1217 = vmatpush.bf16.msra.mxu0 0
      %1218 = vmatpush.bf16.msra.mxu0 0
      %1219 = vmatpush.bf16.msra.mxu0 0
      %1220 = vmatpush.bf16.msra.mxu0 0
      %1221 = vmatpush.bf16.msra.mxu0 0
      %1222 = vmatpush.bf16.msra.mxu0 0
      %1223 = vmatpush.bf16.msra.mxu0 0
      %1224 = vmatpush.bf16.msra.mxu0 %v1215
      %1225 = vmatmul.bf16.gmra.mxu0 %v1203
      %v1226 = vpop.f32.mrf.mxu0
      %v1227 = vadd.f32 0.0, %v1226
      %v1228 = vpop.f32.mrf.mxu0
      %v1229 = vadd.f32 0.0, %v1228
      %1230 = vmatmul.bf16.gmra.mxu0 %v1206
      %v1231 = vpop.f32.mrf.mxu0
      %v1232 = vadd.f32 0.0, %v1231
      %v1233 = vpop.f32.mrf.mxu0
      %v1234 = vadd.f32 0.0, %v1233
      %1235 = vmatmul.bf16.gmra.mxu0 %v1209
      %v1236 = vpop.f32.mrf.mxu0
      %v1237 = vadd.f32 0.0, %v1236
      %v1238 = vpop.f32.mrf.mxu0
      %v1239 = vadd.f32 0.0, %v1238
      %1240 = vmatmul.bf16.gmra.mxu0 %v1212
      %v1241 = vpop.f32.mrf.mxu0
      %v1242 = vadd.f32 0.0, %v1241
      %v1243 = vpop.f32.mrf.mxu0
      %v1244 = vadd.f32 0.0, %v1243
      %1245 = vdwg.mxu0
      %v1246 = vadd.f32 %v926, %v1227
      %v1247 = vadd.f32 %v928, %v1229
      %v1248 = vadd.f32 %v931, %v1232
      %v1249 = vadd.f32 %v933, %v1234
      %v1250 = vadd.f32 %v936, %v1237
      %v1251 = vadd.f32 %v938, %v1239
      %v1252 = vadd.f32 %v941, %v1242
      %v1253 = vadd.f32 %v943, %v1244
      %v1254 = vld [vmem:[#allocation2 + $0x4] sm:$0x8]
      %v1255 = vld [vmem:[#allocation2 + $0x24] sm:$0xf]
      %v1256 = vsel %vm698, %v1254, 0
      %v1257 = vsel %vm705, %v946, 0
      %v1258 = vsel %vm712, %v947, 0
      %v1259 = vsel %vm719, %v948, 0
      %v1260 = vsel %vm726, %v949, 0
      %v1261 = vsel %vm733, %v950, 0
      %v1262 = vsel %vm740, %v951, 0
      %v1263 = vsel %vm747, %v952, 0
      %v1264 = vsel %vm754, %v1255, 0
      %s1265 = scalar_lea.vmem %s3, 12
      %v1266 = vld [vmem:[%s1265] sm:$0xf]
      %v1276 = vunpack.c.l.b16 %v1256
      %v1277 = vunpack.c.l.b16 %v1257
      %v1278 = vunpack.c.l.b16 %v1258
      %v1279 = vunpack.c.l.b16 %v1259
      %v1280 = vunpack.c.l.b16 %v1260
      %v1281 = vunpack.c.l.b16 %v1261
      %v1282 = vunpack.c.l.b16 %v1262
      %v1283 = vunpack.c.l.b16 %v1263
      %v1284 = vunpack.c.l.b16 %v1264
      %v1285 = vpack.c.b16 %v1277, %v1276
      %v1286 = vpack.c.b16 %v1279, %v1278
      %v1287 = vpack.c.b16 %v1281, %v1280
      %v1288 = vpack.c.b16 %v1283, %v1282
      %v1289 = vpack.c.b16 %v1284, %v1284
      %v1291 = vshrl.u32 %v1285, 16
      %v1293 = vrot.slane %v1291, 3
      %v1294 = vshll.u32 %v1285, 16
      %v1296 = vrot.slane %v1294, 4
      %v1297 = vor.u32 %v1293, %v1296
      %v1299 = vshrl.u32 %v1286, 16
      %v1301 = vrot.slane %v1299, 3
      %v1302 = vshll.u32 %v1286, 16
      %v1304 = vrot.slane %v1302, 4
      %v1305 = vor.u32 %v1301, %v1304
      %v1306 = vsel %vm856, %v1297, %v1305
      %v1308 = vshrl.u32 %v1287, 16
      %v1310 = vrot.slane %v1308, 3
      %v1311 = vshll.u32 %v1287, 16
      %v1313 = vrot.slane %v1311, 4
      %v1314 = vor.u32 %v1310, %v1313
      %v1315 = vsel %vm856, %v1305, %v1314
      %v1317 = vshrl.u32 %v1288, 16
      %v1319 = vrot.slane %v1317, 3
      %v1320 = vshll.u32 %v1288, 16
      %v1322 = vrot.slane %v1320, 4
      %v1323 = vor.u32 %v1319, %v1322
      %v1324 = vsel %vm856, %v1314, %v1323
      %v1326 = vshrl.u32 %v1289, 16
      %v1328 = vrot.slane %v1326, 3
      %v1329 = vshll.u32 %v1289, 16
      %v1331 = vrot.slane %v1329, 4
      %v1332 = vor.u32 %v1328, %v1331
      %v1333 = vsel %vm856, %v1323, %v1332
      %v1335 = vsel %vm787, %v1306, 0
      %v1338 = vsel %vm787, %v1315, 0
      %v1341 = vsel %vm787, %v1324, 0
      %v1344 = vsel %vm787, %v1333, 0
      %v1347 = vsel %vm800, %v1266, 0
      %1349 = vmatpush.bf16.msra.mxu0 0
      %1350 = vmatpush.bf16.msra.mxu0 0
      %1351 = vmatpush.bf16.msra.mxu0 0
      %1352 = vmatpush.bf16.msra.mxu0 0
      %1353 = vmatpush.bf16.msra.mxu0 0
      %1354 = vmatpush.bf16.msra.mxu0 0
      %1355 = vmatpush.bf16.msra.mxu0 0
      %1356 = vmatpush.bf16.msra.mxu0 %v1347
      %1357 = vmatmul.bf16.gmra.mxu0 %v1335
      %v1358 = vpop.f32.mrf.mxu0
      %v1359 = vadd.f32 0.0, %v1358
      %v1360 = vpop.f32.mrf.mxu0
      %v1361 = vadd.f32 0.0, %v1360
      %1362 = vmatmul.bf16.gmra.mxu0 %v1338
      %v1363 = vpop.f32.mrf.mxu0
      %v1364 = vadd.f32 0.0, %v1363
      %v1365 = vpop.f32.mrf.mxu0
      %v1366 = vadd.f32 0.0, %v1365
      %1367 = vmatmul.bf16.gmra.mxu0 %v1341
      %v1368 = vpop.f32.mrf.mxu0
      %v1369 = vadd.f32 0.0, %v1368
      %v1370 = vpop.f32.mrf.mxu0
      %v1371 = vadd.f32 0.0, %v1370
      %1372 = vmatmul.bf16.gmra.mxu0 %v1344
      %v1373 = vpop.f32.mrf.mxu0
      %v1374 = vadd.f32 0.0, %v1373
      %v1375 = vpop.f32.mrf.mxu0
      %v1376 = vadd.f32 0.0, %v1375
      %1377 = vdwg.mxu0
      %v1378 = vadd.f32 %v1246, %v1359
      %v1379 = vadd.f32 %v1247, %v1361
      %v1380 = vadd.f32 %v1248, %v1364
      %v1381 = vadd.f32 %v1249, %v1366
      %v1382 = vadd.f32 %v1250, %v1369
      %v1383 = vadd.f32 %v1251, %v1371
      %v1384 = vadd.f32 %v1252, %v1374
      %v1385 = vadd.f32 %v1253, %v1376
      %s1386 = scalar_lea.vmem %s3, 16
      %v1387 = vld [vmem:[%s1386] sm:$0xf]
      %v1396 = vunpack.c.l.b16 %v946
      %v1397 = vunpack.c.l.b16 %v947
      %v1398 = vunpack.c.l.b16 %v948
      %v1399 = vunpack.c.l.b16 %v949
      %v1400 = vunpack.c.l.b16 %v950
      %v1401 = vunpack.c.l.b16 %v951
      %v1402 = vunpack.c.l.b16 %v952
      %v1403 = vunpack.c.l.b16 %v1255
      %v1404 = vpack.c.b16 %v1397, %v1396
      %v1405 = vpack.c.b16 %v1399, %v1398
      %v1406 = vpack.c.b16 %v1401, %v1400
      %v1407 = vpack.c.b16 %v1403, %v1402
      %v1409 = vsel %vm787, %v1404, 0
      %v1412 = vsel %vm787, %v1405, 0
      %v1415 = vsel %vm787, %v1406, 0
      %v1418 = vsel %vm787, %v1407, 0
      %v1421 = vsel %vm800, %v1387, 0
      %1423 = vmatpush.bf16.msra.mxu0 0
      %1424 = vmatpush.bf16.msra.mxu0 0
      %1425 = vmatpush.bf16.msra.mxu0 0
      %1426 = vmatpush.bf16.msra.mxu0 0
      %1427 = vmatpush.bf16.msra.mxu0 0
      %1428 = vmatpush.bf16.msra.mxu0 0
      %1429 = vmatpush.bf16.msra.mxu0 0
      %1430 = vmatpush.bf16.msra.mxu0 %v1421
      %1431 = vmatmul.bf16.gmra.mxu0 %v1409
      %v1432 = vpop.f32.mrf.mxu0
      %v1433 = vadd.f32 0.0, %v1432
      %v1434 = vpop.f32.mrf.mxu0
      %v1435 = vadd.f32 0.0, %v1434
      %1436 = vmatmul.bf16.gmra.mxu0 %v1412
      %v1437 = vpop.f32.mrf.mxu0
      %v1438 = vadd.f32 0.0, %v1437
      %v1439 = vpop.f32.mrf.mxu0
      %v1440 = vadd.f32 0.0, %v1439
      %1441 = vmatmul.bf16.gmra.mxu0 %v1415
      %v1442 = vpop.f32.mrf.mxu0
      %v1443 = vadd.f32 0.0, %v1442
      %v1444 = vpop.f32.mrf.mxu0
      %v1445 = vadd.f32 0.0, %v1444
      %1446 = vmatmul.bf16.gmra.mxu0 %v1418
      %v1447 = vpop.f32.mrf.mxu0
      %v1448 = vadd.f32 0.0, %v1447
      %v1449 = vpop.f32.mrf.mxu0
      %v1450 = vadd.f32 0.0, %v1449
      %1451 = vdwg.mxu0
      %v1452 = vadd.f32 %v1378, %v1433
      %v1453 = vadd.f32 %v1379, %v1435
      %v1454 = vadd.f32 %v1380, %v1438
      %v1455 = vadd.f32 %v1381, %v1440
      %v1456 = vadd.f32 %v1382, %v1443
      %v1457 = vadd.f32 %v1383, %v1445
      %v1458 = vadd.f32 %v1384, %v1448
      %v1459 = vadd.f32 %v1385, %v1450
      %v1460 = vld [vmem:[#allocation2 + $0x8] sm:$0xf]
      %v1461 = vld [vmem:[#allocation2 + $0xc] sm:$0xf]
      %v1462 = vld [vmem:[#allocation2 + $0x10] sm:$0xf]
      %v1463 = vld [vmem:[#allocation2 + $0x14] sm:$0xf]
      %v1464 = vld [vmem:[#allocation2 + $0x18] sm:$0xf]
      %v1465 = vld [vmem:[#allocation2 + $0x1c] sm:$0xf]
      %v1466 = vld [vmem:[#allocation2 + $0x20] sm:$0xf]
      %v1467 = vld [vmem:[#allocation2 + $0x24] sm:$0xf]
      %v1468 = vld [vmem:[#allocation2 + $0x28] sm:$0x1]
      %v1469 = vsel %vm1074, %v1460, 0
      %v1470 = vsel %vm1081, %v1461, 0
      %v1471 = vsel %vm1088, %v1462, 0
      %v1472 = vsel %vm1095, %v1463, 0
      %v1473 = vsel %vm1102, %v1464, 0
      %v1474 = vsel %vm1109, %v1465, 0
      %v1475 = vsel %vm1116, %v1466, 0
      %v1476 = vsel %vm1123, %v1467, 0
      %v1477 = vsel %vm1130, %v1468, 0
      %s1478 = scalar_lea.vmem %s3, 20
      %v1479 = vld [vmem:[%s1478] sm:$0xf]
      %v1489 = vunpack.c.l.b16 %v1469
      %v1490 = vunpack.c.l.b16 %v1470
      %v1491 = vunpack.c.l.b16 %v1471
      %v1492 = vunpack.c.l.b16 %v1472
      %v1493 = vunpack.c.l.b16 %v1473
      %v1494 = vunpack.c.l.b16 %v1474
      %v1495 = vunpack.c.l.b16 %v1475
      %v1496 = vunpack.c.l.b16 %v1476
      %v1497 = vunpack.c.l.b16 %v1477
      %v1498 = vpack.c.b16 %v1490, %v1489
      %v1499 = vpack.c.b16 %v1492, %v1491
      %v1500 = vpack.c.b16 %v1494, %v1493
      %v1501 = vpack.c.b16 %v1496, %v1495
      %v1502 = vpack.c.b16 %v1497, %v1497
      %v1504 = vshrl.u32 %v1498, 16
      %v1506 = vshll.u32 %v1498, 16
      %v1508 = vrot.slane %v1506, 1
      %v1509 = vor.u32 %v1504, %v1508
      %v1511 = vshll.u32 %v1499, 16
      %v1513 = vrot.slane %v1511, 1
      %v1514 = vsel %vm1165, %v1509, %v1513
      %v1515 = vshrl.u32 %v1499, 16
      %v1517 = vor.u32 %v1515, %v1513
      %v1519 = vshll.u32 %v1500, 16
      %v1521 = vrot.slane %v1519, 1
      %v1522 = vsel %vm1165, %v1517, %v1521
      %v1523 = vshrl.u32 %v1500, 16
      %v1525 = vor.u32 %v1523, %v1521
      %v1527 = vshll.u32 %v1501, 16
      %v1529 = vrot.slane %v1527, 1
      %v1530 = vsel %vm1165, %v1525, %v1529
      %v1531 = vshrl.u32 %v1501, 16
      %v1533 = vor.u32 %v1531, %v1529
      %v1535 = vshll.u32 %v1502, 16
      %v1537 = vrot.slane %v1535, 1
      %v1538 = vsel %vm1165, %v1533, %v1537
      %v1540 = vsel %vm787, %v1514, 0
      %v1543 = vsel %vm787, %v1522, 0
      %v1546 = vsel %vm787, %v1530, 0
      %v1549 = vsel %vm787, %v1538, 0
      %v1552 = vsel %vm800, %v1479, 0
      %1554 = vmatpush.bf16.msra.mxu0 0
      %1555 = vmatpush.bf16.msra.mxu0 0
      %1556 = vmatpush.bf16.msra.mxu0 0
      %1557 = vmatpush.bf16.msra.mxu0 0
      %1558 = vmatpush.bf16.msra.mxu0 0
      %1559 = vmatpush.bf16.msra.mxu0 0
      %1560 = vmatpush.bf16.msra.mxu0 0
      %1561 = vmatpush.bf16.msra.mxu0 %v1552
      %1562 = vmatmul.bf16.gmra.mxu0 %v1540
      %v1563 = vpop.f32.mrf.mxu0
      %v1564 = vadd.f32 0.0, %v1563
      %v1565 = vpop.f32.mrf.mxu0
      %v1566 = vadd.f32 0.0, %v1565
      %1567 = vmatmul.bf16.gmra.mxu0 %v1543
      %v1568 = vpop.f32.mrf.mxu0
      %v1569 = vadd.f32 0.0, %v1568
      %v1570 = vpop.f32.mrf.mxu0
      %v1571 = vadd.f32 0.0, %v1570
      %1572 = vmatmul.bf16.gmra.mxu0 %v1546
      %v1573 = vpop.f32.mrf.mxu0
      %v1574 = vadd.f32 0.0, %v1573
      %v1575 = vpop.f32.mrf.mxu0
      %v1576 = vadd.f32 0.0, %v1575
      %1577 = vmatmul.bf16.gmra.mxu0 %v1549
      %v1578 = vpop.f32.mrf.mxu0
      %v1579 = vadd.f32 0.0, %v1578
      %v1580 = vpop.f32.mrf.mxu0
      %v1581 = vadd.f32 0.0, %v1580
      %1582 = vdwg.mxu0
      %v1583 = vadd.f32 %v1452, %v1564
      %v1584 = vadd.f32 %v1453, %v1566
      %v1585 = vadd.f32 %v1454, %v1569
      %v1586 = vadd.f32 %v1455, %v1571
      %v1587 = vadd.f32 %v1456, %v1574
      %v1588 = vadd.f32 %v1457, %v1576
      %v1589 = vadd.f32 %v1458, %v1579
      %v1590 = vadd.f32 %v1459, %v1581
      %v1591 = vld [vmem:[#allocation2 + $0x8] sm:$0x8]
      %v1592 = vld [vmem:[#allocation2 + $0x28] sm:$0xf]
      %v1593 = vsel %vm698, %v1591, 0
      %v1594 = vsel %vm705, %v1461, 0
      %v1595 = vsel %vm712, %v1462, 0
      %v1596 = vsel %vm719, %v1463, 0
      %v1597 = vsel %vm726, %v1464, 0
      %v1598 = vsel %vm733, %v1465, 0
      %v1599 = vsel %vm740, %v1466, 0
      %v1600 = vsel %vm747, %v1467, 0
      %v1601 = vsel %vm754, %v1592, 0
      %s1602 = scalar_lea.vmem %s3, 24
      %v1603 = vld [vmem:[%s1602] sm:$0xf]
      %v1613 = vunpack.c.l.b16 %v1593
      %v1614 = vunpack.c.l.b16 %v1594
      %v1615 = vunpack.c.l.b16 %v1595
      %v1616 = vunpack.c.l.b16 %v1596
      %v1617 = vunpack.c.l.b16 %v1597
      %v1618 = vunpack.c.l.b16 %v1598
      %v1619 = vunpack.c.l.b16 %v1599
      %v1620 = vunpack.c.l.b16 %v1600
      %v1621 = vunpack.c.l.b16 %v1601
      %v1622 = vpack.c.b16 %v1614, %v1613
      %v1623 = vpack.c.b16 %v1616, %v1615
      %v1624 = vpack.c.b16 %v1618, %v1617
      %v1625 = vpack.c.b16 %v1620, %v1619
      %v1626 = vpack.c.b16 %v1621, %v1621
      %v1628 = vshrl.u32 %v1622, 16
      %v1630 = vrot.slane %v1628, 3
      %v1631 = vshll.u32 %v1622, 16
      %v1633 = vrot.slane %v1631, 4
      %v1634 = vor.u32 %v1630, %v1633
      %v1636 = vshrl.u32 %v1623, 16
      %v1638 = vrot.slane %v1636, 3
      %v1639 = vshll.u32 %v1623, 16
      %v1641 = vrot.slane %v1639, 4
      %v1642 = vor.u32 %v1638, %v1641
      %v1643 = vsel %vm856, %v1634, %v1642
      %v1645 = vshrl.u32 %v1624, 16
      %v1647 = vrot.slane %v1645, 3
      %v1648 = vshll.u32 %v1624, 16
      %v1650 = vrot.slane %v1648, 4
      %v1651 = vor.u32 %v1647, %v1650
      %v1652 = vsel %vm856, %v1642, %v1651
      %v1654 = vshrl.u32 %v1625, 16
      %v1656 = vrot.slane %v1654, 3
      %v1657 = vshll.u32 %v1625, 16
      %v1659 = vrot.slane %v1657, 4
      %v1660 = vor.u32 %v1656, %v1659
      %v1661 = vsel %vm856, %v1651, %v1660
      %v1663 = vshrl.u32 %v1626, 16
      %v1665 = vrot.slane %v1663, 3
      %v1666 = vshll.u32 %v1626, 16
      %v1668 = vrot.slane %v1666, 4
      %v1669 = vor.u32 %v1665, %v1668
      %v1670 = vsel %vm856, %v1660, %v1669
      %v1672 = vsel %vm787, %v1643, 0
      %v1675 = vsel %vm787, %v1652, 0
      %v1678 = vsel %vm787, %v1661, 0
      %v1681 = vsel %vm787, %v1670, 0
      %v1684 = vsel %vm800, %v1603, 0
      %1686 = vmatpush.bf16.msra.mxu0 0
      %1687 = vmatpush.bf16.msra.mxu0 0
      %1688 = vmatpush.bf16.msra.mxu0 0
      %1689 = vmatpush.bf16.msra.mxu0 0
      %1690 = vmatpush.bf16.msra.mxu0 0
      %1691 = vmatpush.bf16.msra.mxu0 0
      %1692 = vmatpush.bf16.msra.mxu0 0
      %1693 = vmatpush.bf16.msra.mxu0 %v1684
      %1694 = vmatmul.bf16.gmra.mxu0 %v1672
      %v1695 = vpop.f32.mrf.mxu0
      %v1696 = vadd.f32 0.0, %v1695
      %v1697 = vpop.f32.mrf.mxu0
      %v1698 = vadd.f32 0.0, %v1697
      %1699 = vmatmul.bf16.gmra.mxu0 %v1675
      %v1700 = vpop.f32.mrf.mxu0
      %v1701 = vadd.f32 0.0, %v1700
      %v1702 = vpop.f32.mrf.mxu0
      %v1703 = vadd.f32 0.0, %v1702
      %1704 = vmatmul.bf16.gmra.mxu0 %v1678
      %v1705 = vpop.f32.mrf.mxu0
      %v1706 = vadd.f32 0.0, %v1705
      %v1707 = vpop.f32.mrf.mxu0
      %v1708 = vadd.f32 0.0, %v1707
      %1709 = vmatmul.bf16.gmra.mxu0 %v1681
      %v1710 = vpop.f32.mrf.mxu0
      %v1711 = vadd.f32 0.0, %v1710
      %v1712 = vpop.f32.mrf.mxu0
      %v1713 = vadd.f32 0.0, %v1712
      %1714 = vdwg.mxu0
      %v1715 = vadd.f32 %v1583, %v1696
      %v1716 = vadd.f32 %v1584, %v1698
      %v1717 = vadd.f32 %v1585, %v1701
      %v1718 = vadd.f32 %v1586, %v1703
      %v1719 = vadd.f32 %v1587, %v1706
      %v1720 = vadd.f32 %v1588, %v1708
      %v1721 = vadd.f32 %v1589, %v1711
      %v1722 = vadd.f32 %v1590, %v1713
      %s1723 = scalar_lea.vmem %s3, 28
      %v1724 = vld [vmem:[%s1723] sm:$0xf]
      %v1733 = vunpack.c.l.b16 %v1461
      %v1734 = vunpack.c.l.b16 %v1462
      %v1735 = vunpack.c.l.b16 %v1463
      %v1736 = vunpack.c.l.b16 %v1464
      %v1737 = vunpack.c.l.b16 %v1465
      %v1738 = vunpack.c.l.b16 %v1466
      %v1739 = vunpack.c.l.b16 %v1467
      %v1740 = vunpack.c.l.b16 %v1592
      %v1741 = vpack.c.b16 %v1734, %v1733
      %v1742 = vpack.c.b16 %v1736, %v1735
      %v1743 = vpack.c.b16 %v1738, %v1737
      %v1744 = vpack.c.b16 %v1740, %v1739
      %v1746 = vsel %vm787, %v1741, 0
      %v1749 = vsel %vm787, %v1742, 0
      %v1752 = vsel %vm787, %v1743, 0
      %v1755 = vsel %vm787, %v1744, 0
      %v1758 = vsel %vm800, %v1724, 0
      %1760 = vmatpush.bf16.msra.mxu0 0
      %1761 = vmatpush.bf16.msra.mxu0 0
      %1762 = vmatpush.bf16.msra.mxu0 0
      %1763 = vmatpush.bf16.msra.mxu0 0
      %1764 = vmatpush.bf16.msra.mxu0 0
      %1765 = vmatpush.bf16.msra.mxu0 0
      %1766 = vmatpush.bf16.msra.mxu0 0
      %1767 = vmatpush.bf16.msra.mxu0 %v1758
      %1768 = vmatmul.bf16.gmra.mxu0 %v1746
      %v1769 = vpop.f32.mrf.mxu0
      %v1770 = vadd.f32 0.0, %v1769
      %v1771 = vpop.f32.mrf.mxu0
      %v1772 = vadd.f32 0.0, %v1771
      %1773 = vmatmul.bf16.gmra.mxu0 %v1749
      %v1774 = vpop.f32.mrf.mxu0
      %v1775 = vadd.f32 0.0, %v1774
      %v1776 = vpop.f32.mrf.mxu0
      %v1777 = vadd.f32 0.0, %v1776
      %1778 = vmatmul.bf16.gmra.mxu0 %v1752
      %v1779 = vpop.f32.mrf.mxu0
      %v1780 = vadd.f32 0.0, %v1779
      %v1781 = vpop.f32.mrf.mxu0
      %v1782 = vadd.f32 0.0, %v1781
      %1783 = vmatmul.bf16.gmra.mxu0 %v1755
      %v1784 = vpop.f32.mrf.mxu0
      %v1785 = vadd.f32 0.0, %v1784
      %v1786 = vpop.f32.mrf.mxu0
      %v1787 = vadd.f32 0.0, %v1786
      %1788 = vdwg.mxu0
      %v1789 = vadd.f32 %v1715, %v1770
      %v1790 = vadd.f32 %v1716, %v1772
      %v1791 = vadd.f32 %v1717, %v1775
      %v1792 = vadd.f32 %v1718, %v1777
      %v1793 = vadd.f32 %v1719, %v1780
      %v1794 = vadd.f32 %v1720, %v1782
      %v1795 = vadd.f32 %v1721, %v1785
      %v1796 = vadd.f32 %v1722, %v1787
      %v1797 = vld [vmem:[#allocation2 + $0xc] sm:$0xf]
      %v1798 = vld [vmem:[#allocation2 + $0x10] sm:$0xf]
      %v1799 = vld [vmem:[#allocation2 + $0x14] sm:$0xf]
      %v1800 = vld [vmem:[#allocation2 + $0x18] sm:$0xf]
      %v1801 = vld [vmem:[#allocation2 + $0x1c] sm:$0xf]
      %v1802 = vld [vmem:[#allocation2 + $0x20] sm:$0xf]
      %v1803 = vld [vmem:[#allocation2 + $0x24] sm:$0xf]
      %v1804 = vld [vmem:[#allocation2 + $0x28] sm:$0xf]
      %v1805 = vld [vmem:[#allocation2 + $0x2c] sm:$0x1]
      %v1806 = vsel %vm1074, %v1797, 0
      %v1807 = vsel %vm1081, %v1798, 0
      %v1808 = vsel %vm1088, %v1799, 0
      %v1809 = vsel %vm1095, %v1800, 0
      %v1810 = vsel %vm1102, %v1801, 0
      %v1811 = vsel %vm1109, %v1802, 0
      %v1812 = vsel %vm1116, %v1803, 0
      %v1813 = vsel %vm1123, %v1804, 0
      %v1814 = vsel %vm1130, %v1805, 0
      %s1815 = scalar_lea.vmem %s3, 32
      %v1816 = vld [vmem:[%s1815] sm:$0xf]
      %v1826 = vunpack.c.l.b16 %v1806
      %v1827 = vunpack.c.l.b16 %v1807
      %v1828 = vunpack.c.l.b16 %v1808
      %v1829 = vunpack.c.l.b16 %v1809
      %v1830 = vunpack.c.l.b16 %v1810
      %v1831 = vunpack.c.l.b16 %v1811
      %v1832 = vunpack.c.l.b16 %v1812
      %v1833 = vunpack.c.l.b16 %v1813
      %v1834 = vunpack.c.l.b16 %v1814
      %v1835 = vpack.c.b16 %v1827, %v1826
      %v1836 = vpack.c.b16 %v1829, %v1828
      %v1837 = vpack.c.b16 %v1831, %v1830
      %v1838 = vpack.c.b16 %v1833, %v1832
      %v1839 = vpack.c.b16 %v1834, %v1834
      %v1841 = vshrl.u32 %v1835, 16
      %v1843 = vshll.u32 %v1835, 16
      %v1845 = vrot.slane %v1843, 1
      %v1846 = vor.u32 %v1841, %v1845
      %v1848 = vshll.u32 %v1836, 16
      %v1850 = vrot.slane %v1848, 1
      %v1851 = vsel %vm1165, %v1846, %v1850
      %v1852 = vshrl.u32 %v1836, 16
      %v1854 = vor.u32 %v1852, %v1850
      %v1856 = vshll.u32 %v1837, 16
      %v1858 = vrot.slane %v1856, 1
      %v1859 = vsel %vm1165, %v1854, %v1858
      %v1860 = vshrl.u32 %v1837, 16
      %v1862 = vor.u32 %v1860, %v1858
      %v1864 = vshll.u32 %v1838, 16
      %v1866 = vrot.slane %v1864, 1
      %v1867 = vsel %vm1165, %v1862, %v1866
      %v1868 = vshrl.u32 %v1838, 16
      %v1870 = vor.u32 %v1868, %v1866
      %v1872 = vshll.u32 %v1839, 16
      %v1874 = vrot.slane %v1872, 1
      %v1875 = vsel %vm1165, %v1870, %v1874
      %v1877 = vsel %vm787, %v1851, 0
      %v1880 = vsel %vm787, %v1859, 0
      %v1883 = vsel %vm787, %v1867, 0
      %v1886 = vsel %vm787, %v1875, 0
      %v1889 = vsel %vm800, %v1816, 0
      %1891 = vmatpush.bf16.msra.mxu0 0
      %1892 = vmatpush.bf16.msra.mxu0 0
      %1893 = vmatpush.bf16.msra.mxu0 0
      %1894 = vmatpush.bf16.msra.mxu0 0
      %1895 = vmatpush.bf16.msra.mxu0 0
      %1896 = vmatpush.bf16.msra.mxu0 0
      %1897 = vmatpush.bf16.msra.mxu0 0
      %1898 = vmatpush.bf16.msra.mxu0 %v1889
      %1899 = vmatmul.bf16.gmra.mxu0 %v1877
      %v1900 = vpop.f32.mrf.mxu0
      %v1901 = vadd.f32 0.0, %v1900
      %v1902 = vpop.f32.mrf.mxu0
      %v1903 = vadd.f32 0.0, %v1902
      %1904 = vmatmul.bf16.gmra.mxu0 %v1880
      %v1905 = vpop.f32.mrf.mxu0
      %v1906 = vadd.f32 0.0, %v1905
      %v1907 = vpop.f32.mrf.mxu0
      %v1908 = vadd.f32 0.0, %v1907
      %1909 = vmatmul.bf16.gmra.mxu0 %v1883
      %v1910 = vpop.f32.mrf.mxu0
      %v1911 = vadd.f32 0.0, %v1910
      %v1912 = vpop.f32.mrf.mxu0
      %v1913 = vadd.f32 0.0, %v1912
      %1914 = vmatmul.bf16.gmra.mxu0 %v1886
      %v1915 = vpop.f32.mrf.mxu0
      %v1916 = vadd.f32 0.0, %v1915
      %v1917 = vpop.f32.mrf.mxu0
      %v1918 = vadd.f32 0.0, %v1917
      %1919 = vdwg.mxu0
      %v1920 = vadd.f32 %v1789, %v1901
      %v1921 = vadd.f32 %v1790, %v1903
      %v1922 = vadd.f32 %v1791, %v1906
      %v1923 = vadd.f32 %v1792, %v1908
      %v1924 = vadd.f32 %v1793, %v1911
      %v1925 = vadd.f32 %v1794, %v1913
      %v1926 = vadd.f32 %v1795, %v1916
      %v1927 = vadd.f32 %v1796, %v1918
      %v1928 = vld [vmem:[%s4] sm:$0x1]
      %v1930 = vperm.slane %v1928, 0
      %v1932 = vadd.f32 %v1920, %v1930
      %v1933 = vadd.f32 %v1921, %v1930
      %v1934 = vadd.f32 %v1922, %v1930
      %v1935 = vadd.f32 %v1923, %v1930
      %v1936 = vadd.f32 %v1924, %v1930
      %v1937 = vadd.f32 %v1925, %v1930
      %v1938 = vadd.f32 %v1926, %v1930
      %v1939 = vadd.f32 %v1927, %v1930
      %v1940 = vmax.f32 %v1932, 0.0
      %v1941 = vmax.f32 %v1933, 0.0
      %v1942 = vmax.f32 %v1934, 0.0
      %v1943 = vmax.f32 %v1935, 0.0
      %v1944 = vmax.f32 %v1936, 0.0
      %v1945 = vmax.f32 %v1937, 0.0
      %v1946 = vmax.f32 %v1938, 0.0
      %v1947 = vmax.f32 %v1939, 0.0
      %v1948 = vpack.c.bf16 %v1941, %v1940
      %v1949 = vpack.c.bf16 %v1943, %v1942
      %v1950 = vpack.c.bf16 %v1945, %v1944
      %v1951 = vpack.c.bf16 %v1947, %v1946
      %v1952 = vld [vmem:[%s5] sm:$0xf]
      %v1953 = vld [vmem:[%s6] sm:$0x1]
      %v1955 = vperm.slane %v1953, 0
      %v1958 = vsel %vm787, %v1948, 0
      %v1961 = vsel %vm787, %v1949, 0
      %v1964 = vsel %vm787, %v1950, 0
      %v1967 = vsel %vm787, %v1951, 0
      %v1970 = vsel %vm800, %v1952, 0
      %1972 = vmatpush.bf16.msra.mxu0 0
      %1973 = vmatpush.bf16.msra.mxu0 0
      %1974 = vmatpush.bf16.msra.mxu0 0
      %1975 = vmatpush.bf16.msra.mxu0 0
      %1976 = vmatpush.bf16.msra.mxu0 0
      %1977 = vmatpush.bf16.msra.mxu0 0
      %1978 = vmatpush.bf16.msra.mxu0 0
      %1979 = vmatpush.bf16.msra.mxu0 %v1970
      %1980 = vmatmul.bf16.gmra.mxu0 %v1958
      %v1981 = vpop.f32.mrf.mxu0
      %v1982 = vadd.f32 %v1955, %v1981
      %v1983 = vpop.f32.mrf.mxu0
      %v1984 = vadd.f32 %v1955, %v1983
      %1985 = vmatmul.bf16.gmra.mxu0 %v1961
      %v1986 = vpop.f32.mrf.mxu0
      %v1987 = vadd.f32 %v1955, %v1986
      %v1988 = vpop.f32.mrf.mxu0
      %v1989 = vadd.f32 %v1955, %v1988
      %1990 = vmatmul.bf16.gmra.mxu0 %v1964
      %v1991 = vpop.f32.mrf.mxu0
      %v1992 = vadd.f32 %v1955, %v1991
      %v1993 = vpop.f32.mrf.mxu0
      %v1994 = vadd.f32 %v1955, %v1993
      %1995 = vmatmul.bf16.gmra.mxu0 %v1967
      %v1996 = vpop.f32.mrf.mxu0
      %v1997 = vadd.f32 %v1955, %v1996
      %v1998 = vpop.f32.mrf.mxu0
      %v1999 = vadd.f32 %v1955, %v1998
      %2000 = vdwg.mxu0
      %vm2001 = vcmask 523264
      %v2003 = vsel %vm2001, 1065369472, 0
      %2005 = vmatpush.bf16.msra.mxu0 0
      %2006 = vmatpush.bf16.msra.mxu0 0
      %2007 = vmatpush.bf16.msra.mxu0 0
      %2008 = vmatpush.bf16.msra.mxu0 0
      %2009 = vmatpush.bf16.msra.mxu0 %v1951
      %2010 = vmatpush.bf16.msra.mxu0 %v1950
      %2011 = vmatpush.bf16.msra.mxu0 %v1949
      %2012 = vmatpush.bf16.msra.mxu0 %v1948
      %2013 = vmatmul.bf16.gmra.mxu0 %v2003
      %v2014 = vpop.f32.mrf.mxu0
      %v2015 = vadd.f32 0.0, %v2014
      %v2016 = vpop.f32.mrf.mxu0
      %2017 = vdwg.mxu0
      %v2018 = vmul.f32 %v2015, 0.015625
      %v2019 = vpack.c.bf16 %v2018, %v2018
      %v2021 = vsel %vm787, %v2019, 0
      %2023 = vmatpush.bf16.msra.mxu0 0
      %2024 = vmatpush.bf16.msra.mxu0 0
      %2025 = vmatpush.bf16.msra.mxu0 0
      %2026 = vmatpush.bf16.msra.mxu0 0
      %2027 = vmatpush.bf16.msra.mxu0 0
      %2028 = vmatpush.bf16.msra.mxu0 0
      %2029 = vmatpush.bf16.msra.mxu0 0
      %2030 = vmatpush.bf16.msra.mxu0 %v1970
      %2031 = vmatmul.bf16.gmra.mxu0 %v2021
      %v2032 = vpop.f32.mrf.mxu0
      %v2033 = vadd.f32 %v1953, %v2032
      %v2034 = vpop.f32.mrf.mxu0
      %2035 = vdwg.mxu0
      %v2036 = vpack.c.bf16 %v2033, %v2033
      %v2037 = vld [vmem:[%s7] sm:$0xf]
      %v2038 = vld [vmem:[%s7 + $0x4] sm:$0xf]
      %v2039 = vld [vmem:[%s7 + $0x8] sm:$0xf]
      %v2040 = vld [vmem:[%s7 + $0xc] sm:$0xf]
      %v2045 = vunpack.c.l.b16 %v2037
      %v2046 = vunpack.c.l.b16 %v2038
      %v2047 = vunpack.c.l.b16 %v2039
      %v2048 = vunpack.c.l.b16 %v2040
      %v2049 = vpack.c.b16 %v2046, %v2045
      %v2050 = vpack.c.b16 %v2048, %v2047
      %v2054 = vsel %vm385, %v2036, 0
      %2056 = vmatpush.bf16.msra.mxu0 0
      %2057 = vmatpush.bf16.msra.mxu0 0
      %2058 = vmatpush.bf16.msra.mxu0 0
      %2059 = vmatpush.bf16.msra.mxu0 0
      %2060 = vmatpush.bf16.msra.mxu0 0
      %2061 = vmatpush.bf16.msra.mxu0 0
      %2062 = vmatpush.bf16.msra.mxu0 %v2050
      %2063 = vmatpush.bf16.msra.mxu0 %v2049
      %2064 = vmatmul.bf16.gmra.mxu0 %v2054
      %v2065 = vpop.f32.mrf.mxu0
      %v2066 = vadd.f32 0.0, %v2065
      %v2067 = vpop.f32.mrf.mxu0
      %2068 = vdwg.mxu0
      %v2069 = vmax.f32 %v2066, 0.0
      %v2070 = vpack.c.bf16 %v2069, %v2069
      %v2071 = vld [vmem:[%s8] sm:$0x1]
      %vm2072 = vcmask 15360
      %v2074 = vsel %vm2072, %v2070, 0
      %vm2076 = vcmask 1040384
      %v2078 = vsel %vm2076, %v2071, 0
      %2080 = vmatpush.bf16.msra.mxu0 0
      %2081 = vmatpush.bf16.msra.mxu0 0
      %2082 = vmatpush.bf16.msra.mxu0 0
      %2083 = vmatpush.bf16.msra.mxu0 0
      %2084 = vmatpush.bf16.msra.mxu0 0
      %2085 = vmatpush.bf16.msra.mxu0 0
      %2086 = vmatpush.bf16.msra.mxu0 0
      %2087 = vmatpush.bf16.msra.mxu0 %v2078
      %2088 = vmatmul.bf16.gmra.mxu0 %v2074
      %v2089 = vpop.f32.mrf.mxu0
      %v2090 = vadd.f32 0.0, %v2089
      %v2091 = vpop.f32.mrf.mxu0
      %2092 = vdwg.mxu0
      %v2093 = vxor.u32 %v2090, 2147483648
      %v2094 = vmul.f32 %v2093, 1.442695
      %v2095 = vpow.pop %v2094
      %v2096 = vadd.f32 %v2095, 1.0
      %v2097 = vrcp.pop %v2096
      %v2098 = vmul.f32 %v2096, %v2097
      %v2099 = vsub.f32 1.0, %v2098
      %v2100 = vmul.f32 %v2097, %v2099
      %v2101 = vadd.f32 %v2097, %v2100
      %vm2102 = vweird.f32 %v2096
      %vm2103 = vweird.f32 %v2097
      %vm2104 = vmor %vm2102, %vm2103
      %v2105 = vsel %vm2104, %v2097, %v2101
      %v2106 = vand.u32 2147483647, %v2096
      %vm2107 = vcmp.eq.f32.partialorder %v2106, 8.507059e+37
      %v2108 = vand.u32 %v2096, 2147483648
      %v2109 = vor.u32 1.1754944e-38, %v2108
      %v2110 = vsel %vm2107, %v2109, %v2105
      %v2111 = vmul.f32 1.0, %v2110
      %v2112 = vperm.slane %v2111, 0
      %v2113 = vmul.f32 %v1982, %v2112
      %v2114 = vmul.f32 %v1984, %v2112
      %v2115 = vmul.f32 %v1987, %v2112
      %v2116 = vmul.f32 %v1989, %v2112
      %v2117 = vmul.f32 %v1992, %v2112
      %v2118 = vmul.f32 %v1994, %v2112
      %v2119 = vmul.f32 %v1997, %v2112
      %v2120 = vmul.f32 %v1999, %v2112
      %v2121 = vunpack.c.l.bf16 %v337
      %v2122 = vunpack.c.l.bf16 %v338
      %v2123 = vunpack.c.l.bf16 %v339
      %v2124 = vunpack.c.l.bf16 %v340
      %v2125 = vunpack.c.l.bf16 %v341
      %v2126 = vunpack.c.l.bf16 %v342
      %v2127 = vunpack.c.l.bf16 %v343
      %v2128 = vunpack.c.l.bf16 %v344
      %v2129 = vadd.f32 %v2113, %v2121
      %v2130 = vadd.f32 %v2114, %v2122
      %v2131 = vadd.f32 %v2115, %v2123
      %v2132 = vadd.f32 %v2116, %v2124
      %v2133 = vadd.f32 %v2117, %v2125
      %v2134 = vadd.f32 %v2118, %v2126
      %v2135 = vadd.f32 %v2119, %v2127
      %v2136 = vadd.f32 %v2120, %v2128
      %v2137 = vmax.f32 %v2129, 0.0
      %v2138 = vmax.f32 %v2130, 0.0
      %v2139 = vmax.f32 %v2131, 0.0
      %v2140 = vmax.f32 %v2132, 0.0
      %v2141 = vmax.f32 %v2133, 0.0
      %v2142 = vmax.f32 %v2134, 0.0
      %v2143 = vmax.f32 %v2135, 0.0
      %v2144 = vmax.f32 %v2136, 0.0
      %v2145 = vpack.c.bf16 %v2137, %v2137
      %v2146 = vpack.c.bf16 %v2138, %v2138
      %v2147 = vpack.c.bf16 %v2139, %v2139
      %v2148 = vpack.c.bf16 %v2140, %v2140
      %v2149 = vpack.c.bf16 %v2141, %v2141
      %v2150 = vpack.c.bf16 %v2142, %v2142
      %v2151 = vpack.c.bf16 %v2143, %v2143
      %v2152 = vpack.c.bf16 %v2144, %v2144
      %vm2153 = vcmask 257024
      %2154 = vst.msk [vmem:[%s332] sm:$0xf] %vm2153, %v2145
      %2155 = vst.msk [vmem:[%s332 + $0x4] sm:$0xf] %vm2153, %v2146
      %2156 = vst.msk [vmem:[%s332 + $0x8] sm:$0xf] %vm2153, %v2147
      %2157 = vst.msk [vmem:[%s332 + $0xc] sm:$0xf] %vm2153, %v2148
      %2158 = vst.msk [vmem:[%s332 + $0x10] sm:$0xf] %vm2153, %v2149
      %2159 = vst.msk [vmem:[%s332 + $0x14] sm:$0xf] %vm2153, %v2150
      %2160 = vst.msk [vmem:[%s332 + $0x18] sm:$0xf] %vm2153, %v2151
      %2161 = vst.msk [vmem:[%s332 + $0x1c] sm:$0xf] %vm2153, %v2152
      %p2162 = scmp.lt.s32.totalorder %s20, 1
      %s2163 = scalar_select %p2162, %s20, 1
      %s2164 = smul.addr %s2163, 8
      %s2165 = smul.addr %s2164, 4
      %s2166 = scalar_lea.vmem %s9, %s2165
      // Predicated region
      $region57: #{tpu_custom_call.1} parent=55 // pred_check
        %p2167 = pneg %p232
      $region58: #{tpu_custom_call.1} parent=55 // pred_check_branch
        %2169 = sbr.rel (%p2167) target = $region60
      $region59: #{tpu_custom_call.1} parent=55 // pred_region
        _
      $region60: #{tpu_custom_call.1} parent=55 // pred_fallthru
        _
    $region56: #{tpu_custom_call.1} parent=5 // pred_fallthru
      _
    %p2170 = scmp.le.s32.totalorder 2, %s15
    // Predicated region
    $region61: #{tpu_custom_call.1} parent=5 // pred_check
      %p2171 = pneg %p2170
    $region62: #{tpu_custom_call.1} parent=5 // pred_check_branch
      %2173 = sbr.rel (%p2171) target = $region64
    $region63: #{tpu_custom_call.1} parent=5 // pred_region
      %s2174 = ssub.s32 %s15, 2
      // Predicated region
      $region65: #{tpu_custom_call.1} parent=63 // pred_check
        %p2175 = pneg %p238
      $region66: #{tpu_custom_call.1} parent=63 // pred_check_branch
        %2177 = sbr.rel (%p2175) target = $region68
      $region67: #{tpu_custom_call.1} parent=63 // pred_region
        %p2178 = scmp.lt.s32.totalorder %s21, 1
        %s2179 = scalar_select %p2178, %s21, 1
        %s2180 = smul.addr %s2179, 8
        %s2181 = smul.addr %s2180, 4
        %s2182 = scalar_lea.vmem %s9, %s2181
      $region68: #{tpu_custom_call.1} parent=63 // pred_fallthru
        _
    $region64: #{tpu_custom_call.1} parent=5 // pred_fallthru
      _
  $region6: #{tpu_custom_call.1} parent=0 // loop_footer
    %s19 = sadd.s32 1, %s15
  $region7: #{tpu_custom_call.1} parent=0 // loop_footer_branch
    %14 = sbr.rel target = $region3
  $region8: #{tpu_custom_call.1} parent=0 // loop_exit
    _

</llo_original>
